<compile_context>
chip_gen: v5e
topology: v5e:2x2
jax: 0.10.0
libtpu: 0.0.40
codegen_flags: <defaults>
</compile_context>

<pallas_src>
import functools

import jax
import jax.numpy as jnp
from jax.experimental import pallas as pl
from jax.experimental.pallas import tpu as pltpu


# ---------------------------------------------------------------------------
# Hardware-aware tiling budget
# ---------------------------------------------------------------------------
def _tpu_vmem_capacity():
    try:
        return int(pltpu.get_tpu_info().vmem_capacity_bytes)
    except Exception:
        return 64 << 20                      # conservative default (v7x-like)


@functools.lru_cache(maxsize=None)
def _tile_budget():
    cap = _tpu_vmem_capacity()
    if cap <= (80 << 20):
        # v7x-like: 64 MiB VMEM, 2 TensorCores -> keep >=2 parallel grid steps.
        return {"budget_bytes": 20 << 20, "max_lane_tile": 16384,
                "prefer_two_steps": True, "vmem_cap": cap}
    # v5e / v6e: 128 MiB VMEM, single TensorCore -> bigger tiles, no 2-step need.
    return {"budget_bytes": 48 << 20, "max_lane_tile": 32768,
            "prefer_two_steps": False, "vmem_cap": cap}


def _compiler_params(need_bytes, dims):
    b = _tile_budget()
    limit = int(min(max(int(need_bytes * 1.25) + (8 << 20), 32 << 20),
                    b["vmem_cap"] - (8 << 20)))
    return pltpu.CompilerParams(dimension_semantics=dims,
                                vmem_limit_bytes=limit)


def _pick_tm(ms, batch, cap, prefer_two):
    """Lane tile along the flattened per-batch spatial dim (nh*nw)."""
    cap = max(256, cap)
    # Single full-extent block when it fits (and the 2-step preference allows).
    if ms <= cap and (not prefer_two or batch >= 2 or ms <= 256):
        return ms, 1
    # Largest multiple-of-128 divisor of Ms that fits the budget.
    t = (min(cap, ms) // 128) * 128
    fallback = None
    while t >= 128:
        if ms % t == 0:
            if not prefer_two or batch * (ms // t) >= 2:
                return t, ms // t
            if fallback is None:
                fallback = (t, ms // t)
        t -= 128
    if fallback is not None:
        return fallback
    # Ragged Ms with no usable divisor: overhanging (masked) last block.
    t = max(128, min((cap // 128) * 128, (ms // 128) * 128))
    return t, pl.cdiv(ms, t)


def _pick_th(nh, nw, batch, d, cap_elems, prefer_two):
    """Output-row tile for the fused path (nh % TH == 0, block-shape legal)."""
    max_unroll = max(1, 256 // (d * d))          # bound kernel unroll size
    cap_th = max(1, min(cap_elems // max(nw, 1), max_unroll))
    cands = []
    for t in range(1, nh + 1):
        if nh % t:
            continue
        if t != nh and (t * d) % 8 != 0:         # input block 2nd-minor = TH*d
            continue
        if t > cap_th:
            continue
        cands.append(t)
    if not cands:
        return None
    if prefer_two:
        good = [t for t in cands if batch * (nh // t) >= 2]
        if good:
            return max(good)
    return max(cands)


def _is_tracer(x):
    try:
        return isinstance(x, jax.core.Tracer)
    except Exception:
        return False


# ---------------------------------------------------------------------------
# Kernels
# ---------------------------------------------------------------------------
def _patch_linear_kernel(p_ref, w_ref, b_ref, o_ref):
    # p_ref: (1, K, TM)  w_ref: (N, K)  b_ref: (N, 1)  o_ref: (1, N, TM)
    acc = jnp.dot(w_ref[...], p_ref[0], preferred_element_type=jnp.float32)
    o_ref[0] = (acc + b_ref[...]).astype(o_ref.dtype)


def _fused_unfold_kernel(x_ref, w_ref, b_ref, o_ref, pt_ref, *, d, nw, th):
    # x_ref: (1, c, TH*d, W)   w_ref: (N, K) with K ordered (kh, kw, c)
    # b_ref: (N, 1)            o_ref: (1, N, TH*nw)   pt_ref: (K, TH*nw)
    c = x_ref.shape[1]
    # Assemble the (K, TH*nw) patch tile in VMEM straight from the NCHW block:
    # lane-strided reads pick every d-th column; store offsets are static.
    for i in range(th):
        for kh in range(d):
            for kw in range(d):
                rows = x_ref[0, :, i * d + kh, pl.ds(kw, nw, d)]      # (c, nw)
                pt_ref[pl.ds((kh * d + kw) * c, c),
                       pl.ds(i * nw, nw)] = rows
    acc = jnp.dot(w_ref[...], pt_ref[...], preferred_element_type=jnp.float32)
    o_ref[0] = (acc + b_ref[...]).astype(o_ref.dtype)


# ---------------------------------------------------------------------------
# Forward paths
# ---------------------------------------------------------------------------
def _forward_fused(x, weight, bias, d, out_dtype):
    """Fused in-kernel unfold: x is read once, straight from NCHW."""
    b, c, h, w = x.shape
    nh, nw = h // d, w // d
    if h != nh * d or w != nw * d:
        x = x[:, :, : nh * d, : nw * d]          # nn.Unfold drops the remainder
    h, w = nh * d, nw * d

    K = c * d * d
    N = weight.shape[0]
    Ms = nh * nw
    out_size = jnp.dtype(out_dtype).itemsize

    budget = _tile_budget()
    per_elem = 2 * (4 * c * d * d + out_size * N) + 4 * K   # 2x buffered + scratch
    cap_elems = max(nw, min(budget["max_lane_tile"],
                            budget["budget_bytes"] // per_elem))
    th = _pick_th(nh, nw, b, d, cap_elems, budget["prefer_two_steps"])
    if th is None:
        raise ValueError("no legal row tile for the fused unfold path")
    tile = th * nw

    # Reorder Linear weight columns from (c, kh, kw) to (kh, kw, c) so they
    # match the scratch-tile row order.  Tiny, done once in the wrapper.
    w_r = weight.reshape(N, c, d, d).transpose(0, 2, 3, 1).reshape(N, K)
    b_col = bias.reshape(N, 1).astype(jnp.float32)

    need_bytes = per_elem * tile + w_r.size * 4 + 4 * N
    cost = pl.CostEstimate(
        flops=2 * b * Ms * K * N, transcendentals=0,
        bytes_accessed=int(x.size * x.dtype.itemsize + w_r.size * 4 + 4 * N
                           + b * N * Ms * out_size))

    kern = functools.partial(_fused_unfold_kernel, d=d, nw=nw, th=th)

    out = pl.pallas_call(
        kern,
        out_shape=jax.ShapeDtypeStruct((b, N, Ms), out_dtype),
        grid=(b, nh // th),
        in_specs=[
            # native NCHW rows for TH output rows: (1, c, TH*d, W)
            pl.BlockSpec((1, c, th * d, w), lambda bi, hi: (bi, 0, hi, 0)),
            # resident weight / bias
            pl.BlockSpec((N, K), lambda bi, hi: (0, 0)),
            pl.BlockSpec((N, 1), lambda bi, hi: (0, 0)),
        ],
        # lane-dense channel-major output block (1, N, TH*nw)
        out_specs=pl.BlockSpec((1, N, tile), lambda bi, hi: (bi, 0, hi)),
        scratch_shapes=[pltpu.VMEM((K, tile), jnp.float32)],
        compiler_params=_compiler_params(need_bytes, ("parallel", "parallel")),
        cost_estimate=cost,
    )(x, w_r, b_col)
    return out.reshape(b, N, nh, nw)


def _forward_unfused(x, weight, bias, d, out_dtype):
    """Fallback: materialize the lane-dense (b, K, Ms) patch slab, then matmul."""
    b, c, h, w = x.shape
    nh, nw = h // d, w // d
    if h != nh * d or w != nw * d:
        x = x[:, :, : nh * d, : nw * d]

    K = c * d * d
    N = weight.shape[0]
    Ms = nh * nw
    out_size = jnp.dtype(out_dtype).itemsize

    # nn.Unfold(kernel_size=d, stride=d): lane-dense (K, nh*nw) slab per batch.
    xp = x.reshape(b, c, nh, d, nw, d)
    xp = jnp.transpose(xp, (0, 1, 3, 5, 2, 4))
    patches = xp.reshape(b, K, Ms)

    budget = _tile_budget()
    per_elem = 2 * (4 * K + out_size * N)
    cap_elems = max(256, min(budget["max_lane_tile"],
                             budget["budget_bytes"] // per_elem))
    tm, grid_m = _pick_tm(Ms, b, cap_elems, budget["prefer_two_steps"])
    need_bytes = per_elem * tm + weight.size * 4 + 4 * N

    b_col = bias.reshape(N, 1).astype(jnp.float32)
    cost = pl.CostEstimate(
        flops=2 * b * Ms * K * N, transcendentals=0,
        bytes_accessed=int(patches.size * 4 + weight.size * 4 + 4 * N
                           + b * N * Ms * out_size))

    out = pl.pallas_call(
        _patch_linear_kernel,
        out_shape=jax.ShapeDtypeStruct((b, N, Ms), out_dtype),
        grid=(b, grid_m),
        in_specs=[
            pl.BlockSpec((1, K, tm), lambda bi, mi: (bi, 0, mi)),
            pl.BlockSpec((N, K), lambda bi, mi: (0, 0)),
            pl.BlockSpec((N, 1), lambda bi, mi: (0, 0)),
        ],
        out_specs=pl.BlockSpec((1, N, tm), lambda bi, mi: (bi, 0, mi)),
        compiler_params=_compiler_params(need_bytes, ("parallel", "parallel")),
        cost_estimate=cost,
    )(patches, weight, b_col)
    return out.reshape(b, N, nh, nw)


# ---------------------------------------------------------------------------
# Fused-path capability probe (lane-strided ref reads are backend-dependent)
# ---------------------------------------------------------------------------
_FUSED_OK = None


def _fused_supported():
    global _FUSED_OK
    if _FUSED_OK is not None:
        return _FUSED_OK
    ok = False
    try:
        key = jax.random.PRNGKey(1234)
        ok = True
        for shape in ((2, 3, 32, 32), (1, 3, 16, 320)):
            key, k1, k2, k3 = jax.random.split(key, 4)
            xx = jax.random.normal(k1, shape, jnp.float32)
            n_in = shape[1] * 4
            wgt = jax.random.uniform(k2, (64, n_in), jnp.float32, -0.3, 0.3)
            bia = jax.random.uniform(k3, (64,), jnp.float32, -0.3, 0.3)
            got = _forward_fused(xx, wgt, bia, 2, jnp.dtype(jnp.float32))
            want = patch_merging_reference(xx, wgt, bia, 2)
            ok = ok and bool(jnp.allclose(got, want, rtol=2e-4, atol=2e-4))
    except Exception:
        ok = False
    _FUSED_OK = ok
    return ok


# ---------------------------------------------------------------------------
# Public forward
# ---------------------------------------------------------------------------
def patch_merging_forward(x, weight, bias, downscaling_factor=2,
                          out_dtype=None, use_fused=None):
    """Equivalent of PatchMerging.forward (NCHW in, NCHW out).

    weight: (out_channels, in_channels*d*d)  -- nn.Linear layout
    bias:   (out_channels,)
    out_dtype: output dtype (default x.dtype).  bf16 halves the dominant
               (64-channel) store stream when the consumer allows it.
    use_fused: force the in-kernel unfold on/off; None = auto-detect.
    """
    d = downscaling_factor
    out_dtype = jnp.dtype(x.dtype if out_dtype is None else out_dtype)

    if use_fused is None:
        use_fused = bool(_FUSED_OK) if _is_tracer(x) else _fused_supported()
    if use_fused:
        try:
            return _forward_fused(x, weight, bias, d, out_dtype)
        except Exception:
            pass                                  # fall back to materialized path
    return _forward_unfused(x, weight, bias, d, out_dtype)


# ---------------------------------------------------------------------------
# Reference (pure JAX, mirrors the PyTorch module op-for-op) + init
# ---------------------------------------------------------------------------
def patch_merging_reference(x, weight, bias, downscaling_factor=2):
    b, c, h, w = x.shape
    d = downscaling_factor
    nh, nw = h // d, w // d
    xp = x[:, :, : nh * d, : nw * d].reshape(b, c, nh, d, nw, d)
    xp = jnp.transpose(xp, (0, 2, 4, 1, 3, 5)).reshape(b, nh, nw, c * d * d)
    y = xp @ weight.T + bias                      # nn.Linear
    return jnp.transpose(y, (0, 3, 1, 2))         # -> NCHW


def init_patch_merging_params(key, in_channels=3, out_channels=64,
                              downscaling_factor=2):
    """Deterministic init mirroring nn.Linear(in_channels*d^2, out_channels)."""
    k_in = in_channels * downscaling_factor ** 2
    bound = 1.0 / jnp.sqrt(jnp.array(k_in, jnp.float32))
    kw, kb = jax.random.split(key)
    weight = jax.random.uniform(kw, (out_channels, k_in), jnp.float32, -bound, bound)
    bias = jax.random.uniform(kb, (out_channels,), jnp.float32, -bound, bound)
    return {"pm_weight": weight, "pm_bias": bias}


if __name__ == "__main__":
    key = jax.random.PRNGKey(0)
    k_param, k_x = jax.random.split(key)

    # Small deterministic input consistent with PatchMerging(3, 64): NCHW.
    x = jax.random.normal(k_x, (2, 3, 32, 32), dtype=jnp.float32)
    params = init_patch_merging_params(k_param, in_channels=3, out_channels=64)
    wgt, bia = params["pm_weight"], params["pm_bias"]

    ref = patch_merging_reference(x, wgt, bia, downscaling_factor=2)

    # Auto path (fused in-kernel unfold when the backend supports it).
    out = patch_merging_forward(x, wgt, bia, downscaling_factor=2)
    out = jax.block_until_ready(out)
    assert out.shape == (2, 64, 16, 16), out.shape
    assert jnp.allclose(out, ref, rtol=1e-4, atol=1e-4), float(
        jnp.max(jnp.abs(out - ref)))

    # Explicitly exercise the materialized-unfold fallback path too.
    out_fb = jax.block_until_ready(
        patch_merging_forward(x, wgt, bia, downscaling_factor=2,
                              use_fused=False))
    assert jnp.allclose(out_fb, ref, rtol=1e-4, atol=1e-4)

    # bf16-output knob (output bytes dominate HBM traffic 64:12).
    out_bf16 = jax.block_until_ready(
        patch_merging_forward(x, wgt, bia, downscaling_factor=2,
                              out_dtype=jnp.bfloat16))
    assert out_bf16.dtype == jnp.bfloat16
    assert jnp.allclose(out_bf16.astype(jnp.float32), ref, rtol=5e-2, atol=5e-2)

    print("KERNEL_OK")
</pallas_src>

<mosaic_0001>
module attributes {stable_mosaic.version = 11 : i64} {
  func.func @_fused_unfold_kernel(%arg0: i32, %arg1: i32, %arg2: memref<1x3x32x32xf32, #tpu.memory_space<vmem>>, %arg3: memref<64x12xf32, #tpu.memory_space<vmem>>, %arg4: memref<64x1xf32, #tpu.memory_space<vmem>>, %arg5: memref<1x64x256xf32, #tpu.memory_space<vmem>>, %arg6: memref<12x256xf32, #tpu.memory_space<vmem>>) attributes {dimension_semantics = [#tpu.dimension_semantics<parallel>, #tpu.dimension_semantics<parallel>], iteration_bounds = array<i64: 2, 1>, scalar_prefetch = 0 : i64, scratch_operands = 1 : i64, tpu.core_type = #tpu.core_type<tc>, window_params = [{transform_indices = @transform_0, window_bounds = array<i64: 1, 3, 32, 32>}, {pipeline_mode = #tpu.pipeline_mode<synchronous>, transform_indices = @transform_1, window_bounds = array<i64: 64, 12>}, {pipeline_mode = #tpu.pipeline_mode<synchronous>, transform_indices = @transform_2, window_bounds = array<i64: 64, 1>}, {transform_indices = @transform_3, window_bounds = array<i64: 1, 64, 256>}]} {
    %c0 = arith.constant 0 : index
    %c0_0 = arith.constant 0 : index
    %c0_1 = arith.constant 0 : index
    %c0_2 = arith.constant 0 : index
    %0 = tpu.strided_load %arg2[%c0, %c0_0, %c0_1, %c0_2] {strides = array<i32: 1, 1, 1, 2>} : memref<1x3x32x32xf32, #tpu.memory_space<vmem>>, vector<1x3x1x16xf32>
    %1 = vector.shape_cast %0 : vector<1x3x1x16xf32> to vector<3x16xf32>
    %c0_3 = arith.constant 0 : index
    %c0_4 = arith.constant 0 : index
    %2 = vector.load %arg6[%c0_3, %c0_4] : memref<12x256xf32, #tpu.memory_space<vmem>>, vector<3x16xf32>
    tpu.vector_store %arg6[%c0_3, %c0_4], %1 {strides = array<i32>} : memref<12x256xf32, #tpu.memory_space<vmem>>, vector<3x16xf32>,
    %c0_5 = arith.constant 0 : index
    %c0_6 = arith.constant 0 : index
    %c0_7 = arith.constant 0 : index
    %c1 = arith.constant 1 : index
    %3 = tpu.strided_load %arg2[%c0_5, %c0_6, %c0_7, %c1] {strides = array<i32: 1, 1, 1, 2>} : memref<1x3x32x32xf32, #tpu.memory_space<vmem>>, vector<1x3x1x16xf32>
    %4 = vector.shape_cast %3 : vector<1x3x1x16xf32> to vector<3x16xf32>
    %c3 = arith.constant 3 : index
    %c0_8 = arith.constant 0 : index
    %5 = vector.load %arg6[%c3, %c0_8] : memref<12x256xf32, #tpu.memory_space<vmem>>, vector<3x16xf32>
    tpu.vector_store %arg6[%c3, %c0_8], %4 {strides = array<i32>} : memref<12x256xf32, #tpu.memory_space<vmem>>, vector<3x16xf32>,
    %c0_9 = arith.constant 0 : index
    %c0_10 = arith.constant 0 : index
    %c1_11 = arith.constant 1 : index
    %c0_12 = arith.constant 0 : index
    %6 = tpu.strided_load %arg2[%c0_9, %c0_10, %c1_11, %c0_12] {strides = array<i32: 1, 1, 1, 2>} : memref<1x3x32x32xf32, #tpu.memory_space<vmem>>, vector<1x3x1x16xf32>
    %7 = vector.shape_cast %6 : vector<1x3x1x16xf32> to vector<3x16xf32>
    %c6 = arith.constant 6 : index
    %c0_13 = arith.constant 0 : index
    %8 = vector.load %arg6[%c6, %c0_13] : memref<12x256xf32, #tpu.memory_space<vmem>>, vector<3x16xf32>
    tpu.vector_store %arg6[%c6, %c0_13], %7 {strides = array<i32>} : memref<12x256xf32, #tpu.memory_space<vmem>>, vector<3x16xf32>,
    %c0_14 = arith.constant 0 : index
    %c0_15 = arith.constant 0 : index
    %c1_16 = arith.constant 1 : index
    %c1_17 = arith.constant 1 : index
    %9 = tpu.strided_load %arg2[%c0_14, %c0_15, %c1_16, %c1_17] {strides = array<i32: 1, 1, 1, 2>} : memref<1x3x32x32xf32, #tpu.memory_space<vmem>>, vector<1x3x1x16xf32>
    %10 = vector.shape_cast %9 : vector<1x3x1x16xf32> to vector<3x16xf32>
    %c9 = arith.constant 9 : index
    %c0_18 = arith.constant 0 : index
    %11 = vector.load %arg6[%c9, %c0_18] : memref<12x256xf32, #tpu.memory_space<vmem>>, vector<3x16xf32>
    tpu.vector_store %arg6[%c9, %c0_18], %10 {strides = array<i32>} : memref<12x256xf32, #tpu.memory_space<vmem>>, vector<3x16xf32>,
    %c0_19 = arith.constant 0 : index
    %c0_20 = arith.constant 0 : index
    %c2 = arith.constant 2 : index
    %c0_21 = arith.constant 0 : index
    %12 = tpu.strided_load %arg2[%c0_19, %c0_20, %c2, %c0_21] {strides = array<i32: 1, 1, 1, 2>} : memref<1x3x32x32xf32, #tpu.memory_space<vmem>>, vector<1x3x1x16xf32>
    %13 = vector.shape_cast %12 : vector<1x3x1x16xf32> to vector<3x16xf32>
    %c0_22 = arith.constant 0 : index
    %c16 = arith.constant 16 : index
    %14 = vector.load %arg6[%c0_22, %c16] : memref<12x256xf32, #tpu.memory_space<vmem>>, vector<3x16xf32>
    tpu.vector_store %arg6[%c0_22, %c16], %13 {strides = array<i32>} : memref<12x256xf32, #tpu.memory_space<vmem>>, vector<3x16xf32>,
    %c0_23 = arith.constant 0 : index
    %c0_24 = arith.constant 0 : index
    %c2_25 = arith.constant 2 : index
    %c1_26 = arith.constant 1 : index
    %15 = tpu.strided_load %arg2[%c0_23, %c0_24, %c2_25, %c1_26] {strides = array<i32: 1, 1, 1, 2>} : memref<1x3x32x32xf32, #tpu.memory_space<vmem>>, vector<1x3x1x16xf32>
    %16 = vector.shape_cast %15 : vector<1x3x1x16xf32> to vector<3x16xf32>
    %c3_27 = arith.constant 3 : index
    %c16_28 = arith.constant 16 : index
    %17 = vector.load %arg6[%c3_27, %c16_28] : memref<12x256xf32, #tpu.memory_space<vmem>>, vector<3x16xf32>
    tpu.vector_store %arg6[%c3_27, %c16_28], %16 {strides = array<i32>} : memref<12x256xf32, #tpu.memory_space<vmem>>, vector<3x16xf32>,
    %c0_29 = arith.constant 0 : index
    %c0_30 = arith.constant 0 : index
    %c3_31 = arith.constant 3 : index
    %c0_32 = arith.constant 0 : index
    %18 = tpu.strided_load %arg2[%c0_29, %c0_30, %c3_31, %c0_32] {strides = array<i32: 1, 1, 1, 2>} : memref<1x3x32x32xf32, #tpu.memory_space<vmem>>, vector<1x3x1x16xf32>
    %19 = vector.shape_cast %18 : vector<1x3x1x16xf32> to vector<3x16xf32>
    %c6_33 = arith.constant 6 : index
    %c16_34 = arith.constant 16 : index
    %20 = vector.load %arg6[%c6_33, %c16_34] : memref<12x256xf32, #tpu.memory_space<vmem>>, vector<3x16xf32>
    tpu.vector_store %arg6[%c6_33, %c16_34], %19 {strides = array<i32>} : memref<12x256xf32, #tpu.memory_space<vmem>>, vector<3x16xf32>,
    %c0_35 = arith.constant 0 : index
    %c0_36 = arith.constant 0 : index
    %c3_37 = arith.constant 3 : index
    %c1_38 = arith.constant 1 : index
    %21 = tpu.strided_load %arg2[%c0_35, %c0_36, %c3_37, %c1_38] {strides = array<i32: 1, 1, 1, 2>} : memref<1x3x32x32xf32, #tpu.memory_space<vmem>>, vector<1x3x1x16xf32>
    %22 = vector.shape_cast %21 : vector<1x3x1x16xf32> to vector<3x16xf32>
    %c9_39 = arith.constant 9 : index
    %c16_40 = arith.constant 16 : index
    %23 = vector.load %arg6[%c9_39, %c16_40] : memref<12x256xf32, #tpu.memory_space<vmem>>, vector<3x16xf32>
    tpu.vector_store %arg6[%c9_39, %c16_40], %22 {strides = array<i32>} : memref<12x256xf32, #tpu.memory_space<vmem>>, vector<3x16xf32>,
    %c0_41 = arith.constant 0 : index
    %c0_42 = arith.constant 0 : index
    %c4 = arith.constant 4 : index
    %c0_43 = arith.constant 0 : index
    %24 = tpu.strided_load %arg2[%c0_41, %c0_42, %c4, %c0_43] {strides = array<i32: 1, 1, 1, 2>} : memref<1x3x32x32xf32, #tpu.memory_space<vmem>>, vector<1x3x1x16xf32>
    %25 = vector.shape_cast %24 : vector<1x3x1x16xf32> to vector<3x16xf32>
    %c0_44 = arith.constant 0 : index
    %c32 = arith.constant 32 : index
    %26 = vector.load %arg6[%c0_44, %c32] : memref<12x256xf32, #tpu.memory_space<vmem>>, vector<3x16xf32>
    tpu.vector_store %arg6[%c0_44, %c32], %25 {strides = array<i32>} : memref<12x256xf32, #tpu.memory_space<vmem>>, vector<3x16xf32>,
    %c0_45 = arith.constant 0 : index
    %c0_46 = arith.constant 0 : index
    %c4_47 = arith.constant 4 : index
    %c1_48 = arith.constant 1 : index
    %27 = tpu.strided_load %arg2[%c0_45, %c0_46, %c4_47, %c1_48] {strides = array<i32: 1, 1, 1, 2>} : memref<1x3x32x32xf32, #tpu.memory_space<vmem>>, vector<1x3x1x16xf32>
    %28 = vector.shape_cast %27 : vector<1x3x1x16xf32> to vector<3x16xf32>
    %c3_49 = arith.constant 3 : index
    %c32_50 = arith.constant 32 : index
    %29 = vector.load %arg6[%c3_49, %c32_50] : memref<12x256xf32, #tpu.memory_space<vmem>>, vector<3x16xf32>
    tpu.vector_store %arg6[%c3_49, %c32_50], %28 {strides = array<i32>} : memref<12x256xf32, #tpu.memory_space<vmem>>, vector<3x16xf32>,
    %c0_51 = arith.constant 0 : index
    %c0_52 = arith.constant 0 : index
    %c5 = arith.constant 5 : index
    %c0_53 = arith.constant 0 : index
    %30 = tpu.strided_load %arg2[%c0_51, %c0_52, %c5, %c0_53] {strides = array<i32: 1, 1, 1, 2>} : memref<1x3x32x32xf32, #tpu.memory_space<vmem>>, vector<1x3x1x16xf32>
    %31 = vector.shape_cast %30 : vector<1x3x1x16xf32> to vector<3x16xf32>
    %c6_54 = arith.constant 6 : index
    %c32_55 = arith.constant 32 : index
    %32 = vector.load %arg6[%c6_54, %c32_55] : memref<12x256xf32, #tpu.memory_space<vmem>>, vector<3x16xf32>
    tpu.vector_store %arg6[%c6_54, %c32_55], %31 {strides = array<i32>} : memref<12x256xf32, #tpu.memory_space<vmem>>, vector<3x16xf32>,
    %c0_56 = arith.constant 0 : index
    %c0_57 = arith.constant 0 : index
    %c5_58 = arith.constant 5 : index
    %c1_59 = arith.constant 1 : index
    %33 = tpu.strided_load %arg2[%c0_56, %c0_57, %c5_58, %c1_59] {strides = array<i32: 1, 1, 1, 2>} : memref<1x3x32x32xf32, #tpu.memory_space<vmem>>, vector<1x3x1x16xf32>
    %34 = vector.shape_cast %33 : vector<1x3x1x16xf32> to vector<3x16xf32>
    %c9_60 = arith.constant 9 : index
    %c32_61 = arith.constant 32 : index
    %35 = vector.load %arg6[%c9_60, %c32_61] : memref<12x256xf32, #tpu.memory_space<vmem>>, vector<3x16xf32>
    tpu.vector_store %arg6[%c9_60, %c32_61], %34 {strides = array<i32>} : memref<12x256xf32, #tpu.memory_space<vmem>>, vector<3x16xf32>,
    %c0_62 = arith.constant 0 : index
    %c0_63 = arith.constant 0 : index
    %c6_64 = arith.constant 6 : index
    %c0_65 = arith.constant 0 : index
    %36 = tpu.strided_load %arg2[%c0_62, %c0_63, %c6_64, %c0_65] {strides = array<i32: 1, 1, 1, 2>} : memref<1x3x32x32xf32, #tpu.memory_space<vmem>>, vector<1x3x1x16xf32>
    %37 = vector.shape_cast %36 : vector<1x3x1x16xf32> to vector<3x16xf32>
    %c0_66 = arith.constant 0 : index
    %c48 = arith.constant 48 : index
    %38 = vector.load %arg6[%c0_66, %c48] : memref<12x256xf32, #tpu.memory_space<vmem>>, vector<3x16xf32>
    tpu.vector_store %arg6[%c0_66, %c48], %37 {strides = array<i32>} : memref<12x256xf32, #tpu.memory_space<vmem>>, vector<3x16xf32>,
    %c0_67 = arith.constant 0 : index
    %c0_68 = arith.constant 0 : index
    %c6_69 = arith.constant 6 : index
    %c1_70 = arith.constant 1 : index
    %39 = tpu.strided_load %arg2[%c0_67, %c0_68, %c6_69, %c1_70] {strides = array<i32: 1, 1, 1, 2>} : memref<1x3x32x32xf32, #tpu.memory_space<vmem>>, vector<1x3x1x16xf32>
    %40 = vector.shape_cast %39 : vector<1x3x1x16xf32> to vector<3x16xf32>
    %c3_71 = arith.constant 3 : index
    %c48_72 = arith.constant 48 : index
    %41 = vector.load %arg6[%c3_71, %c48_72] : memref<12x256xf32, #tpu.memory_space<vmem>>, vector<3x16xf32>
    tpu.vector_store %arg6[%c3_71, %c48_72], %40 {strides = array<i32>} : memref<12x256xf32, #tpu.memory_space<vmem>>, vector<3x16xf32>,
    %c0_73 = arith.constant 0 : index
    %c0_74 = arith.constant 0 : index
    %c7 = arith.constant 7 : index
    %c0_75 = arith.constant 0 : index
    %42 = tpu.strided_load %arg2[%c0_73, %c0_74, %c7, %c0_75] {strides = array<i32: 1, 1, 1, 2>} : memref<1x3x32x32xf32, #tpu.memory_space<vmem>>, vector<1x3x1x16xf32>
    %43 = vector.shape_cast %42 : vector<1x3x1x16xf32> to vector<3x16xf32>
    %c6_76 = arith.constant 6 : index
    %c48_77 = arith.constant 48 : index
    %44 = vector.load %arg6[%c6_76, %c48_77] : memref<12x256xf32, #tpu.memory_space<vmem>>, vector<3x16xf32>
    tpu.vector_store %arg6[%c6_76, %c48_77], %43 {strides = array<i32>} : memref<12x256xf32, #tpu.memory_space<vmem>>, vector<3x16xf32>,
    %c0_78 = arith.constant 0 : index
    %c0_79 = arith.constant 0 : index
    %c7_80 = arith.constant 7 : index
    %c1_81 = arith.constant 1 : index
    %45 = tpu.strided_load %arg2[%c0_78, %c0_79, %c7_80, %c1_81] {strides = array<i32: 1, 1, 1, 2>} : memref<1x3x32x32xf32, #tpu.memory_space<vmem>>, vector<1x3x1x16xf32>
    %46 = vector.shape_cast %45 : vector<1x3x1x16xf32> to vector<3x16xf32>
    %c9_82 = arith.constant 9 : index
    %c48_83 = arith.constant 48 : index
    %47 = vector.load %arg6[%c9_82, %c48_83] : memref<12x256xf32, #tpu.memory_space<vmem>>, vector<3x16xf32>
    tpu.vector_store %arg6[%c9_82, %c48_83], %46 {strides = array<i32>} : memref<12x256xf32, #tpu.memory_space<vmem>>, vector<3x16xf32>,
    %c0_84 = arith.constant 0 : index
    %c0_85 = arith.constant 0 : index
    %c8 = arith.constant 8 : index
    %c0_86 = arith.constant 0 : index
    %48 = tpu.strided_load %arg2[%c0_84, %c0_85, %c8, %c0_86] {strides = array<i32: 1, 1, 1, 2>} : memref<1x3x32x32xf32, #tpu.memory_space<vmem>>, vector<1x3x1x16xf32>
    %49 = vector.shape_cast %48 : vector<1x3x1x16xf32> to vector<3x16xf32>
    %c0_87 = arith.constant 0 : index
    %c64 = arith.constant 64 : index
    %50 = vector.load %arg6[%c0_87, %c64] : memref<12x256xf32, #tpu.memory_space<vmem>>, vector<3x16xf32>
    tpu.vector_store %arg6[%c0_87, %c64], %49 {strides = array<i32>} : memref<12x256xf32, #tpu.memory_space<vmem>>, vector<3x16xf32>,
    %c0_88 = arith.constant 0 : index
    %c0_89 = arith.constant 0 : index
    %c8_90 = arith.constant 8 : index
    %c1_91 = arith.constant 1 : index
    %51 = tpu.strided_load %arg2[%c0_88, %c0_89, %c8_90, %c1_91] {strides = array<i32: 1, 1, 1, 2>} : memref<1x3x32x32xf32, #tpu.memory_space<vmem>>, vector<1x3x1x16xf32>
    %52 = vector.shape_cast %51 : vector<1x3x1x16xf32> to vector<3x16xf32>
    %c3_92 = arith.constant 3 : index
    %c64_93 = arith.constant 64 : index
    %53 = vector.load %arg6[%c3_92, %c64_93] : memref<12x256xf32, #tpu.memory_space<vmem>>, vector<3x16xf32>
    tpu.vector_store %arg6[%c3_92, %c64_93], %52 {strides = array<i32>} : memref<12x256xf32, #tpu.memory_space<vmem>>, vector<3x16xf32>,
    %c0_94 = arith.constant 0 : index
    %c0_95 = arith.constant 0 : index
    %c9_96 = arith.constant 9 : index
    %c0_97 = arith.constant 0 : index
    %54 = tpu.strided_load %arg2[%c0_94, %c0_95, %c9_96, %c0_97] {strides = array<i32: 1, 1, 1, 2>} : memref<1x3x32x32xf32, #tpu.memory_space<vmem>>, vector<1x3x1x16xf32>
    %55 = vector.shape_cast %54 : vector<1x3x1x16xf32> to vector<3x16xf32>
    %c6_98 = arith.constant 6 : index
    %c64_99 = arith.constant 64 : index
    %56 = vector.load %arg6[%c6_98, %c64_99] : memref<12x256xf32, #tpu.memory_space<vmem>>, vector<3x16xf32>
    tpu.vector_store %arg6[%c6_98, %c64_99], %55 {strides = array<i32>} : memref<12x256xf32, #tpu.memory_space<vmem>>, vector<3x16xf32>,
    %c0_100 = arith.constant 0 : index
    %c0_101 = arith.constant 0 : index
    %c9_102 = arith.constant 9 : index
    %c1_103 = arith.constant 1 : index
    %57 = tpu.strided_load %arg2[%c0_100, %c0_101, %c9_102, %c1_103] {strides = array<i32: 1, 1, 1, 2>} : memref<1x3x32x32xf32, #tpu.memory_space<vmem>>, vector<1x3x1x16xf32>
    %58 = vector.shape_cast %57 : vector<1x3x1x16xf32> to vector<3x16xf32>
    %c9_104 = arith.constant 9 : index
    %c64_105 = arith.constant 64 : index
    %59 = vector.load %arg6[%c9_104, %c64_105] : memref<12x256xf32, #tpu.memory_space<vmem>>, vector<3x16xf32>
    tpu.vector_store %arg6[%c9_104, %c64_105], %58 {strides = array<i32>} : memref<12x256xf32, #tpu.memory_space<vmem>>, vector<3x16xf32>,
    %c0_106 = arith.constant 0 : index
    %c0_107 = arith.constant 0 : index
    %c10 = arith.constant 10 : index
    %c0_108 = arith.constant 0 : index
    %60 = tpu.strided_load %arg2[%c0_106, %c0_107, %c10, %c0_108] {strides = array<i32: 1, 1, 1, 2>} : memref<1x3x32x32xf32, #tpu.memory_space<vmem>>, vector<1x3x1x16xf32>
    %61 = vector.shape_cast %60 : vector<1x3x1x16xf32> to vector<3x16xf32>
    %c0_109 = arith.constant 0 : index
    %c80 = arith.constant 80 : index
    %62 = vector.load %arg6[%c0_109, %c80] : memref<12x256xf32, #tpu.memory_space<vmem>>, vector<3x16xf32>
    tpu.vector_store %arg6[%c0_109, %c80], %61 {strides = array<i32>} : memref<12x256xf32, #tpu.memory_space<vmem>>, vector<3x16xf32>,
    %c0_110 = arith.constant 0 : index
    %c0_111 = arith.constant 0 : index
    %c10_112 = arith.constant 10 : index
    %c1_113 = arith.constant 1 : index
    %63 = tpu.strided_load %arg2[%c0_110, %c0_111, %c10_112, %c1_113] {strides = array<i32: 1, 1, 1, 2>} : memref<1x3x32x32xf32, #tpu.memory_space<vmem>>, vector<1x3x1x16xf32>
    %64 = vector.shape_cast %63 : vector<1x3x1x16xf32> to vector<3x16xf32>
    %c3_114 = arith.constant 3 : index
    %c80_115 = arith.constant 80 : index
    %65 = vector.load %arg6[%c3_114, %c80_115] : memref<12x256xf32, #tpu.memory_space<vmem>>, vector<3x16xf32>
    tpu.vector_store %arg6[%c3_114, %c80_115], %64 {strides = array<i32>} : memref<12x256xf32, #tpu.memory_space<vmem>>, vector<3x16xf32>,
    %c0_116 = arith.constant 0 : index
    %c0_117 = arith.constant 0 : index
    %c11 = arith.constant 11 : index
    %c0_118 = arith.constant 0 : index
    %66 = tpu.strided_load %arg2[%c0_116, %c0_117, %c11, %c0_118] {strides = array<i32: 1, 1, 1, 2>} : memref<1x3x32x32xf32, #tpu.memory_space<vmem>>, vector<1x3x1x16xf32>
    %67 = vector.shape_cast %66 : vector<1x3x1x16xf32> to vector<3x16xf32>
    %c6_119 = arith.constant 6 : index
    %c80_120 = arith.constant 80 : index
    %68 = vector.load %arg6[%c6_119, %c80_120] : memref<12x256xf32, #tpu.memory_space<vmem>>, vector<3x16xf32>
    tpu.vector_store %arg6[%c6_119, %c80_120], %67 {strides = array<i32>} : memref<12x256xf32, #tpu.memory_space<vmem>>, vector<3x16xf32>,
    %c0_121 = arith.constant 0 : index
    %c0_122 = arith.constant 0 : index
    %c11_123 = arith.constant 11 : index
    %c1_124 = arith.constant 1 : index
    %69 = tpu.strided_load %arg2[%c0_121, %c0_122, %c11_123, %c1_124] {strides = array<i32: 1, 1, 1, 2>} : memref<1x3x32x32xf32, #tpu.memory_space<vmem>>, vector<1x3x1x16xf32>
    %70 = vector.shape_cast %69 : vector<1x3x1x16xf32> to vector<3x16xf32>
    %c9_125 = arith.constant 9 : index
    %c80_126 = arith.constant 80 : index
    %71 = vector.load %arg6[%c9_125, %c80_126] : memref<12x256xf32, #tpu.memory_space<vmem>>, vector<3x16xf32>
    tpu.vector_store %arg6[%c9_125, %c80_126], %70 {strides = array<i32>} : memref<12x256xf32, #tpu.memory_space<vmem>>, vector<3x16xf32>,
    %c0_127 = arith.constant 0 : index
    %c0_128 = arith.constant 0 : index
    %c12 = arith.constant 12 : index
    %c0_129 = arith.constant 0 : index
    %72 = tpu.strided_load %arg2[%c0_127, %c0_128, %c12, %c0_129] {strides = array<i32: 1, 1, 1, 2>} : memref<1x3x32x32xf32, #tpu.memory_space<vmem>>, vector<1x3x1x16xf32>
    %73 = vector.shape_cast %72 : vector<1x3x1x16xf32> to vector<3x16xf32>
    %c0_130 = arith.constant 0 : index
    %c96 = arith.constant 96 : index
    %74 = vector.load %arg6[%c0_130, %c96] : memref<12x256xf32, #tpu.memory_space<vmem>>, vector<3x16xf32>
    tpu.vector_store %arg6[%c0_130, %c96], %73 {strides = array<i32>} : memref<12x256xf32, #tpu.memory_space<vmem>>, vector<3x16xf32>,
    %c0_131 = arith.constant 0 : index
    %c0_132 = arith.constant 0 : index
    %c12_133 = arith.constant 12 : index
    %c1_134 = arith.constant 1 : index
    %75 = tpu.strided_load %arg2[%c0_131, %c0_132, %c12_133, %c1_134] {strides = array<i32: 1, 1, 1, 2>} : memref<1x3x32x32xf32, #tpu.memory_space<vmem>>, vector<1x3x1x16xf32>
    %76 = vector.shape_cast %75 : vector<1x3x1x16xf32> to vector<3x16xf32>
    %c3_135 = arith.constant 3 : index
    %c96_136 = arith.constant 96 : index
    %77 = vector.load %arg6[%c3_135, %c96_136] : memref<12x256xf32, #tpu.memory_space<vmem>>, vector<3x16xf32>
    tpu.vector_store %arg6[%c3_135, %c96_136], %76 {strides = array<i32>} : memref<12x256xf32, #tpu.memory_space<vmem>>, vector<3x16xf32>,
    %c0_137 = arith.constant 0 : index
    %c0_138 = arith.constant 0 : index
    %c13 = arith.constant 13 : index
    %c0_139 = arith.constant 0 : index
    %78 = tpu.strided_load %arg2[%c0_137, %c0_138, %c13, %c0_139] {strides = array<i32: 1, 1, 1, 2>} : memref<1x3x32x32xf32, #tpu.memory_space<vmem>>, vector<1x3x1x16xf32>
    %79 = vector.shape_cast %78 : vector<1x3x1x16xf32> to vector<3x16xf32>
    %c6_140 = arith.constant 6 : index
    %c96_141 = arith.constant 96 : index
    %80 = vector.load %arg6[%c6_140, %c96_141] : memref<12x256xf32, #tpu.memory_space<vmem>>, vector<3x16xf32>
    tpu.vector_store %arg6[%c6_140, %c96_141], %79 {strides = array<i32>} : memref<12x256xf32, #tpu.memory_space<vmem>>, vector<3x16xf32>,
    %c0_142 = arith.constant 0 : index
    %c0_143 = arith.constant 0 : index
    %c13_144 = arith.constant 13 : index
    %c1_145 = arith.constant 1 : index
    %81 = tpu.strided_load %arg2[%c0_142, %c0_143, %c13_144, %c1_145] {strides = array<i32: 1, 1, 1, 2>} : memref<1x3x32x32xf32, #tpu.memory_space<vmem>>, vector<1x3x1x16xf32>
    %82 = vector.shape_cast %81 : vector<1x3x1x16xf32> to vector<3x16xf32>
    %c9_146 = arith.constant 9 : index
    %c96_147 = arith.constant 96 : index
    %83 = vector.load %arg6[%c9_146, %c96_147] : memref<12x256xf32, #tpu.memory_space<vmem>>, vector<3x16xf32>
    tpu.vector_store %arg6[%c9_146, %c96_147], %82 {strides = array<i32>} : memref<12x256xf32, #tpu.memory_space<vmem>>, vector<3x16xf32>,
    %c0_148 = arith.constant 0 : index
    %c0_149 = arith.constant 0 : index
    %c14 = arith.constant 14 : index
    %c0_150 = arith.constant 0 : index
    %84 = tpu.strided_load %arg2[%c0_148, %c0_149, %c14, %c0_150] {strides = array<i32: 1, 1, 1, 2>} : memref<1x3x32x32xf32, #tpu.memory_space<vmem>>, vector<1x3x1x16xf32>
    %85 = vector.shape_cast %84 : vector<1x3x1x16xf32> to vector<3x16xf32>
    %c0_151 = arith.constant 0 : index
    %c112 = arith.constant 112 : index
    %86 = vector.load %arg6[%c0_151, %c112] : memref<12x256xf32, #tpu.memory_space<vmem>>, vector<3x16xf32>
    tpu.vector_store %arg6[%c0_151, %c112], %85 {strides = array<i32>} : memref<12x256xf32, #tpu.memory_space<vmem>>, vector<3x16xf32>,
    %c0_152 = arith.constant 0 : index
    %c0_153 = arith.constant 0 : index
    %c14_154 = arith.constant 14 : index
    %c1_155 = arith.constant 1 : index
    %87 = tpu.strided_load %arg2[%c0_152, %c0_153, %c14_154, %c1_155] {strides = array<i32: 1, 1, 1, 2>} : memref<1x3x32x32xf32, #tpu.memory_space<vmem>>, vector<1x3x1x16xf32>
    %88 = vector.shape_cast %87 : vector<1x3x1x16xf32> to vector<3x16xf32>
    %c3_156 = arith.constant 3 : index
    %c112_157 = arith.constant 112 : index
    %89 = vector.load %arg6[%c3_156, %c112_157] : memref<12x256xf32, #tpu.memory_space<vmem>>, vector<3x16xf32>
    tpu.vector_store %arg6[%c3_156, %c112_157], %88 {strides = array<i32>} : memref<12x256xf32, #tpu.memory_space<vmem>>, vector<3x16xf32>,
    %c0_158 = arith.constant 0 : index
    %c0_159 = arith.constant 0 : index
    %c15 = arith.constant 15 : index
    %c0_160 = arith.constant 0 : index
    %90 = tpu.strided_load %arg2[%c0_158, %c0_159, %c15, %c0_160] {strides = array<i32: 1, 1, 1, 2>} : memref<1x3x32x32xf32, #tpu.memory_space<vmem>>, vector<1x3x1x16xf32>
    %91 = vector.shape_cast %90 : vector<1x3x1x16xf32> to vector<3x16xf32>
    %c6_161 = arith.constant 6 : index
    %c112_162 = arith.constant 112 : index
    %92 = vector.load %arg6[%c6_161, %c112_162] : memref<12x256xf32, #tpu.memory_space<vmem>>, vector<3x16xf32>
    tpu.vector_store %arg6[%c6_161, %c112_162], %91 {strides = array<i32>} : memref<12x256xf32, #tpu.memory_space<vmem>>, vector<3x16xf32>,
    %c0_163 = arith.constant 0 : index
    %c0_164 = arith.constant 0 : index
    %c15_165 = arith.constant 15 : index
    %c1_166 = arith.constant 1 : index
    %93 = tpu.strided_load %arg2[%c0_163, %c0_164, %c15_165, %c1_166] {strides = array<i32: 1, 1, 1, 2>} : memref<1x3x32x32xf32, #tpu.memory_space<vmem>>, vector<1x3x1x16xf32>
    %94 = vector.shape_cast %93 : vector<1x3x1x16xf32> to vector<3x16xf32>
    %c9_167 = arith.constant 9 : index
    %c112_168 = arith.constant 112 : index
    %95 = vector.load %arg6[%c9_167, %c112_168] : memref<12x256xf32, #tpu.memory_space<vmem>>, vector<3x16xf32>
    tpu.vector_store %arg6[%c9_167, %c112_168], %94 {strides = array<i32>} : memref<12x256xf32, #tpu.memory_space<vmem>>, vector<3x16xf32>,
    %c0_169 = arith.constant 0 : index
    %c0_170 = arith.constant 0 : index
    %c16_171 = arith.constant 16 : index
    %c0_172 = arith.constant 0 : index
    %96 = tpu.strided_load %arg2[%c0_169, %c0_170, %c16_171, %c0_172] {strides = array<i32: 1, 1, 1, 2>} : memref<1x3x32x32xf32, #tpu.memory_space<vmem>>, vector<1x3x1x16xf32>
    %97 = vector.shape_cast %96 : vector<1x3x1x16xf32> to vector<3x16xf32>
    %c0_173 = arith.constant 0 : index
    %c128 = arith.constant 128 : index
    %98 = vector.load %arg6[%c0_173, %c128] : memref<12x256xf32, #tpu.memory_space<vmem>>, vector<3x16xf32>
    tpu.vector_store %arg6[%c0_173, %c128], %97 {strides = array<i32>} : memref<12x256xf32, #tpu.memory_space<vmem>>, vector<3x16xf32>,
    %c0_174 = arith.constant 0 : index
    %c0_175 = arith.constant 0 : index
    %c16_176 = arith.constant 16 : index
    %c1_177 = arith.constant 1 : index
    %99 = tpu.strided_load %arg2[%c0_174, %c0_175, %c16_176, %c1_177] {strides = array<i32: 1, 1, 1, 2>} : memref<1x3x32x32xf32, #tpu.memory_space<vmem>>, vector<1x3x1x16xf32>
    %100 = vector.shape_cast %99 : vector<1x3x1x16xf32> to vector<3x16xf32>
    %c3_178 = arith.constant 3 : index
    %c128_179 = arith.constant 128 : index
    %101 = vector.load %arg6[%c3_178, %c128_179] : memref<12x256xf32, #tpu.memory_space<vmem>>, vector<3x16xf32>
    tpu.vector_store %arg6[%c3_178, %c128_179], %100 {strides = array<i32>} : memref<12x256xf32, #tpu.memory_space<vmem>>, vector<3x16xf32>,
    %c0_180 = arith.constant 0 : index
    %c0_181 = arith.constant 0 : index
    %c17 = arith.constant 17 : index
    %c0_182 = arith.constant 0 : index
    %102 = tpu.strided_load %arg2[%c0_180, %c0_181, %c17, %c0_182] {strides = array<i32: 1, 1, 1, 2>} : memref<1x3x32x32xf32, #tpu.memory_space<vmem>>, vector<1x3x1x16xf32>
    %103 = vector.shape_cast %102 : vector<1x3x1x16xf32> to vector<3x16xf32>
    %c6_183 = arith.constant 6 : index
    %c128_184 = arith.constant 128 : index
    %104 = vector.load %arg6[%c6_183, %c128_184] : memref<12x256xf32, #tpu.memory_space<vmem>>, vector<3x16xf32>
    tpu.vector_store %arg6[%c6_183, %c128_184], %103 {strides = array<i32>} : memref<12x256xf32, #tpu.memory_space<vmem>>, vector<3x16xf32>,
    %c0_185 = arith.constant 0 : index
    %c0_186 = arith.constant 0 : index
    %c17_187 = arith.constant 17 : index
    %c1_188 = arith.constant 1 : index
    %105 = tpu.strided_load %arg2[%c0_185, %c0_186, %c17_187, %c1_188] {strides = array<i32: 1, 1, 1, 2>} : memref<1x3x32x32xf32, #tpu.memory_space<vmem>>, vector<1x3x1x16xf32>
    %106 = vector.shape_cast %105 : vector<1x3x1x16xf32> to vector<3x16xf32>
    %c9_189 = arith.constant 9 : index
    %c128_190 = arith.constant 128 : index
    %107 = vector.load %arg6[%c9_189, %c128_190] : memref<12x256xf32, #tpu.memory_space<vmem>>, vector<3x16xf32>
    tpu.vector_store %arg6[%c9_189, %c128_190], %106 {strides = array<i32>} : memref<12x256xf32, #tpu.memory_space<vmem>>, vector<3x16xf32>,
    %c0_191 = arith.constant 0 : index
    %c0_192 = arith.constant 0 : index
    %c18 = arith.constant 18 : index
    %c0_193 = arith.constant 0 : index
    %108 = tpu.strided_load %arg2[%c0_191, %c0_192, %c18, %c0_193] {strides = array<i32: 1, 1, 1, 2>} : memref<1x3x32x32xf32, #tpu.memory_space<vmem>>, vector<1x3x1x16xf32>
    %109 = vector.shape_cast %108 : vector<1x3x1x16xf32> to vector<3x16xf32>
    %c0_194 = arith.constant 0 : index
    %c144 = arith.constant 144 : index
    %110 = vector.load %arg6[%c0_194, %c144] : memref<12x256xf32, #tpu.memory_space<vmem>>, vector<3x16xf32>
    tpu.vector_store %arg6[%c0_194, %c144], %109 {strides = array<i32>} : memref<12x256xf32, #tpu.memory_space<vmem>>, vector<3x16xf32>,
    %c0_195 = arith.constant 0 : index
    %c0_196 = arith.constant 0 : index
    %c18_197 = arith.constant 18 : index
    %c1_198 = arith.constant 1 : index
    %111 = tpu.strided_load %arg2[%c0_195, %c0_196, %c18_197, %c1_198] {strides = array<i32: 1, 1, 1, 2>} : memref<1x3x32x32xf32, #tpu.memory_space<vmem>>, vector<1x3x1x16xf32>
    %112 = vector.shape_cast %111 : vector<1x3x1x16xf32> to vector<3x16xf32>
    %c3_199 = arith.constant 3 : index
    %c144_200 = arith.constant 144 : index
    %113 = vector.load %arg6[%c3_199, %c144_200] : memref<12x256xf32, #tpu.memory_space<vmem>>, vector<3x16xf32>
    tpu.vector_store %arg6[%c3_199, %c144_200], %112 {strides = array<i32>} : memref<12x256xf32, #tpu.memory_space<vmem>>, vector<3x16xf32>,
    %c0_201 = arith.constant 0 : index
    %c0_202 = arith.constant 0 : index
    %c19 = arith.constant 19 : index
    %c0_203 = arith.constant 0 : index
    %114 = tpu.strided_load %arg2[%c0_201, %c0_202, %c19, %c0_203] {strides = array<i32: 1, 1, 1, 2>} : memref<1x3x32x32xf32, #tpu.memory_space<vmem>>, vector<1x3x1x16xf32>
    %115 = vector.shape_cast %114 : vector<1x3x1x16xf32> to vector<3x16xf32>
    %c6_204 = arith.constant 6 : index
    %c144_205 = arith.constant 144 : index
    %116 = vector.load %arg6[%c6_204, %c144_205] : memref<12x256xf32, #tpu.memory_space<vmem>>, vector<3x16xf32>
    tpu.vector_store %arg6[%c6_204, %c144_205], %115 {strides = array<i32>} : memref<12x256xf32, #tpu.memory_space<vmem>>, vector<3x16xf32>,
    %c0_206 = arith.constant 0 : index
    %c0_207 = arith.constant 0 : index
    %c19_208 = arith.constant 19 : index
    %c1_209 = arith.constant 1 : index
    %117 = tpu.strided_load %arg2[%c0_206, %c0_207, %c19_208, %c1_209] {strides = array<i32: 1, 1, 1, 2>} : memref<1x3x32x32xf32, #tpu.memory_space<vmem>>, vector<1x3x1x16xf32>
    %118 = vector.shape_cast %117 : vector<1x3x1x16xf32> to vector<3x16xf32>
    %c9_210 = arith.constant 9 : index
    %c144_211 = arith.constant 144 : index
    %119 = vector.load %arg6[%c9_210, %c144_211] : memref<12x256xf32, #tpu.memory_space<vmem>>, vector<3x16xf32>
    tpu.vector_store %arg6[%c9_210, %c144_211], %118 {strides = array<i32>} : memref<12x256xf32, #tpu.memory_space<vmem>>, vector<3x16xf32>,
    %c0_212 = arith.constant 0 : index
    %c0_213 = arith.constant 0 : index
    %c20 = arith.constant 20 : index
    %c0_214 = arith.constant 0 : index
    %120 = tpu.strided_load %arg2[%c0_212, %c0_213, %c20, %c0_214] {strides = array<i32: 1, 1, 1, 2>} : memref<1x3x32x32xf32, #tpu.memory_space<vmem>>, vector<1x3x1x16xf32>
    %121 = vector.shape_cast %120 : vector<1x3x1x16xf32> to vector<3x16xf32>
    %c0_215 = arith.constant 0 : index
    %c160 = arith.constant 160 : index
    %122 = vector.load %arg6[%c0_215, %c160] : memref<12x256xf32, #tpu.memory_space<vmem>>, vector<3x16xf32>
    tpu.vector_store %arg6[%c0_215, %c160], %121 {strides = array<i32>} : memref<12x256xf32, #tpu.memory_space<vmem>>, vector<3x16xf32>,
    %c0_216 = arith.constant 0 : index
    %c0_217 = arith.constant 0 : index
    %c20_218 = arith.constant 20 : index
    %c1_219 = arith.constant 1 : index
    %123 = tpu.strided_load %arg2[%c0_216, %c0_217, %c20_218, %c1_219] {strides = array<i32: 1, 1, 1, 2>} : memref<1x3x32x32xf32, #tpu.memory_space<vmem>>, vector<1x3x1x16xf32>
    %124 = vector.shape_cast %123 : vector<1x3x1x16xf32> to vector<3x16xf32>
    %c3_220 = arith.constant 3 : index
    %c160_221 = arith.constant 160 : index
    %125 = vector.load %arg6[%c3_220, %c160_221] : memref<12x256xf32, #tpu.memory_space<vmem>>, vector<3x16xf32>
    tpu.vector_store %arg6[%c3_220, %c160_221], %124 {strides = array<i32>} : memref<12x256xf32, #tpu.memory_space<vmem>>, vector<3x16xf32>,
    %c0_222 = arith.constant 0 : index
    %c0_223 = arith.constant 0 : index
    %c21 = arith.constant 21 : index
    %c0_224 = arith.constant 0 : index
    %126 = tpu.strided_load %arg2[%c0_222, %c0_223, %c21, %c0_224] {strides = array<i32: 1, 1, 1, 2>} : memref<1x3x32x32xf32, #tpu.memory_space<vmem>>, vector<1x3x1x16xf32>
    %127 = vector.shape_cast %126 : vector<1x3x1x16xf32> to vector<3x16xf32>
    %c6_225 = arith.constant 6 : index
    %c160_226 = arith.constant 160 : index
    %128 = vector.load %arg6[%c6_225, %c160_226] : memref<12x256xf32, #tpu.memory_space<vmem>>, vector<3x16xf32>
    tpu.vector_store %arg6[%c6_225, %c160_226], %127 {strides = array<i32>} : memref<12x256xf32, #tpu.memory_space<vmem>>, vector<3x16xf32>,
    %c0_227 = arith.constant 0 : index
    %c0_228 = arith.constant 0 : index
    %c21_229 = arith.constant 21 : index
    %c1_230 = arith.constant 1 : index
    %129 = tpu.strided_load %arg2[%c0_227, %c0_228, %c21_229, %c1_230] {strides = array<i32: 1, 1, 1, 2>} : memref<1x3x32x32xf32, #tpu.memory_space<vmem>>, vector<1x3x1x16xf32>
    %130 = vector.shape_cast %129 : vector<1x3x1x16xf32> to vector<3x16xf32>
    %c9_231 = arith.constant 9 : index
    %c160_232 = arith.constant 160 : index
    %131 = vector.load %arg6[%c9_231, %c160_232] : memref<12x256xf32, #tpu.memory_space<vmem>>, vector<3x16xf32>
    tpu.vector_store %arg6[%c9_231, %c160_232], %130 {strides = array<i32>} : memref<12x256xf32, #tpu.memory_space<vmem>>, vector<3x16xf32>,
    %c0_233 = arith.constant 0 : index
    %c0_234 = arith.constant 0 : index
    %c22 = arith.constant 22 : index
    %c0_235 = arith.constant 0 : index
    %132 = tpu.strided_load %arg2[%c0_233, %c0_234, %c22, %c0_235] {strides = array<i32: 1, 1, 1, 2>} : memref<1x3x32x32xf32, #tpu.memory_space<vmem>>, vector<1x3x1x16xf32>
    %133 = vector.shape_cast %132 : vector<1x3x1x16xf32> to vector<3x16xf32>
    %c0_236 = arith.constant 0 : index
    %c176 = arith.constant 176 : index
    %134 = vector.load %arg6[%c0_236, %c176] : memref<12x256xf32, #tpu.memory_space<vmem>>, vector<3x16xf32>
    tpu.vector_store %arg6[%c0_236, %c176], %133 {strides = array<i32>} : memref<12x256xf32, #tpu.memory_space<vmem>>, vector<3x16xf32>,
    %c0_237 = arith.constant 0 : index
    %c0_238 = arith.constant 0 : index
    %c22_239 = arith.constant 22 : index
    %c1_240 = arith.constant 1 : index
    %135 = tpu.strided_load %arg2[%c0_237, %c0_238, %c22_239, %c1_240] {strides = array<i32: 1, 1, 1, 2>} : memref<1x3x32x32xf32, #tpu.memory_space<vmem>>, vector<1x3x1x16xf32>
    %136 = vector.shape_cast %135 : vector<1x3x1x16xf32> to vector<3x16xf32>
    %c3_241 = arith.constant 3 : index
    %c176_242 = arith.constant 176 : index
    %137 = vector.load %arg6[%c3_241, %c176_242] : memref<12x256xf32, #tpu.memory_space<vmem>>, vector<3x16xf32>
    tpu.vector_store %arg6[%c3_241, %c176_242], %136 {strides = array<i32>} : memref<12x256xf32, #tpu.memory_space<vmem>>, vector<3x16xf32>,
    %c0_243 = arith.constant 0 : index
    %c0_244 = arith.constant 0 : index
    %c23 = arith.constant 23 : index
    %c0_245 = arith.constant 0 : index
    %138 = tpu.strided_load %arg2[%c0_243, %c0_244, %c23, %c0_245] {strides = array<i32: 1, 1, 1, 2>} : memref<1x3x32x32xf32, #tpu.memory_space<vmem>>, vector<1x3x1x16xf32>
    %139 = vector.shape_cast %138 : vector<1x3x1x16xf32> to vector<3x16xf32>
    %c6_246 = arith.constant 6 : index
    %c176_247 = arith.constant 176 : index
    %140 = vector.load %arg6[%c6_246, %c176_247] : memref<12x256xf32, #tpu.memory_space<vmem>>, vector<3x16xf32>
    tpu.vector_store %arg6[%c6_246, %c176_247], %139 {strides = array<i32>} : memref<12x256xf32, #tpu.memory_space<vmem>>, vector<3x16xf32>,
    %c0_248 = arith.constant 0 : index
    %c0_249 = arith.constant 0 : index
    %c23_250 = arith.constant 23 : index
    %c1_251 = arith.constant 1 : index
    %141 = tpu.strided_load %arg2[%c0_248, %c0_249, %c23_250, %c1_251] {strides = array<i32: 1, 1, 1, 2>} : memref<1x3x32x32xf32, #tpu.memory_space<vmem>>, vector<1x3x1x16xf32>
    %142 = vector.shape_cast %141 : vector<1x3x1x16xf32> to vector<3x16xf32>
    %c9_252 = arith.constant 9 : index
    %c176_253 = arith.constant 176 : index
    %143 = vector.load %arg6[%c9_252, %c176_253] : memref<12x256xf32, #tpu.memory_space<vmem>>, vector<3x16xf32>
    tpu.vector_store %arg6[%c9_252, %c176_253], %142 {strides = array<i32>} : memref<12x256xf32, #tpu.memory_space<vmem>>, vector<3x16xf32>,
    %c0_254 = arith.constant 0 : index
    %c0_255 = arith.constant 0 : index
    %c24 = arith.constant 24 : index
    %c0_256 = arith.constant 0 : index
    %144 = tpu.strided_load %arg2[%c0_254, %c0_255, %c24, %c0_256] {strides = array<i32: 1, 1, 1, 2>} : memref<1x3x32x32xf32, #tpu.memory_space<vmem>>, vector<1x3x1x16xf32>
    %145 = vector.shape_cast %144 : vector<1x3x1x16xf32> to vector<3x16xf32>
    %c0_257 = arith.constant 0 : index
    %c192 = arith.constant 192 : index
    %146 = vector.load %arg6[%c0_257, %c192] : memref<12x256xf32, #tpu.memory_space<vmem>>, vector<3x16xf32>
    tpu.vector_store %arg6[%c0_257, %c192], %145 {strides = array<i32>} : memref<12x256xf32, #tpu.memory_space<vmem>>, vector<3x16xf32>,
    %c0_258 = arith.constant 0 : index
    %c0_259 = arith.constant 0 : index
    %c24_260 = arith.constant 24 : index
    %c1_261 = arith.constant 1 : index
    %147 = tpu.strided_load %arg2[%c0_258, %c0_259, %c24_260, %c1_261] {strides = array<i32: 1, 1, 1, 2>} : memref<1x3x32x32xf32, #tpu.memory_space<vmem>>, vector<1x3x1x16xf32>
    %148 = vector.shape_cast %147 : vector<1x3x1x16xf32> to vector<3x16xf32>
    %c3_262 = arith.constant 3 : index
    %c192_263 = arith.constant 192 : index
    %149 = vector.load %arg6[%c3_262, %c192_263] : memref<12x256xf32, #tpu.memory_space<vmem>>, vector<3x16xf32>
    tpu.vector_store %arg6[%c3_262, %c192_263], %148 {strides = array<i32>} : memref<12x256xf32, #tpu.memory_space<vmem>>, vector<3x16xf32>,
    %c0_264 = arith.constant 0 : index
    %c0_265 = arith.constant 0 : index
    %c25 = arith.constant 25 : index
    %c0_266 = arith.constant 0 : index
    %150 = tpu.strided_load %arg2[%c0_264, %c0_265, %c25, %c0_266] {strides = array<i32: 1, 1, 1, 2>} : memref<1x3x32x32xf32, #tpu.memory_space<vmem>>, vector<1x3x1x16xf32>
    %151 = vector.shape_cast %150 : vector<1x3x1x16xf32> to vector<3x16xf32>
    %c6_267 = arith.constant 6 : index
    %c192_268 = arith.constant 192 : index
    %152 = vector.load %arg6[%c6_267, %c192_268] : memref<12x256xf32, #tpu.memory_space<vmem>>, vector<3x16xf32>
    tpu.vector_store %arg6[%c6_267, %c192_268], %151 {strides = array<i32>} : memref<12x256xf32, #tpu.memory_space<vmem>>, vector<3x16xf32>,
    %c0_269 = arith.constant 0 : index
    %c0_270 = arith.constant 0 : index
    %c25_271 = arith.constant 25 : index
    %c1_272 = arith.constant 1 : index
    %153 = tpu.strided_load %arg2[%c0_269, %c0_270, %c25_271, %c1_272] {strides = array<i32: 1, 1, 1, 2>} : memref<1x3x32x32xf32, #tpu.memory_space<vmem>>, vector<1x3x1x16xf32>
    %154 = vector.shape_cast %153 : vector<1x3x1x16xf32> to vector<3x16xf32>
    %c9_273 = arith.constant 9 : index
    %c192_274 = arith.constant 192 : index
    %155 = vector.load %arg6[%c9_273, %c192_274] : memref<12x256xf32, #tpu.memory_space<vmem>>, vector<3x16xf32>
    tpu.vector_store %arg6[%c9_273, %c192_274], %154 {strides = array<i32>} : memref<12x256xf32, #tpu.memory_space<vmem>>, vector<3x16xf32>,
    %c0_275 = arith.constant 0 : index
    %c0_276 = arith.constant 0 : index
    %c26 = arith.constant 26 : index
    %c0_277 = arith.constant 0 : index
    %156 = tpu.strided_load %arg2[%c0_275, %c0_276, %c26, %c0_277] {strides = array<i32: 1, 1, 1, 2>} : memref<1x3x32x32xf32, #tpu.memory_space<vmem>>, vector<1x3x1x16xf32>
    %157 = vector.shape_cast %156 : vector<1x3x1x16xf32> to vector<3x16xf32>
    %c0_278 = arith.constant 0 : index
    %c208 = arith.constant 208 : index
    %158 = vector.load %arg6[%c0_278, %c208] : memref<12x256xf32, #tpu.memory_space<vmem>>, vector<3x16xf32>
    tpu.vector_store %arg6[%c0_278, %c208], %157 {strides = array<i32>} : memref<12x256xf32, #tpu.memory_space<vmem>>, vector<3x16xf32>,
    %c0_279 = arith.constant 0 : index
    %c0_280 = arith.constant 0 : index
    %c26_281 = arith.constant 26 : index
    %c1_282 = arith.constant 1 : index
    %159 = tpu.strided_load %arg2[%c0_279, %c0_280, %c26_281, %c1_282] {strides = array<i32: 1, 1, 1, 2>} : memref<1x3x32x32xf32, #tpu.memory_space<vmem>>, vector<1x3x1x16xf32>
    %160 = vector.shape_cast %159 : vector<1x3x1x16xf32> to vector<3x16xf32>
    %c3_283 = arith.constant 3 : index
    %c208_284 = arith.constant 208 : index
    %161 = vector.load %arg6[%c3_283, %c208_284] : memref<12x256xf32, #tpu.memory_space<vmem>>, vector<3x16xf32>
    tpu.vector_store %arg6[%c3_283, %c208_284], %160 {strides = array<i32>} : memref<12x256xf32, #tpu.memory_space<vmem>>, vector<3x16xf32>,
    %c0_285 = arith.constant 0 : index
    %c0_286 = arith.constant 0 : index
    %c27 = arith.constant 27 : index
    %c0_287 = arith.constant 0 : index
    %162 = tpu.strided_load %arg2[%c0_285, %c0_286, %c27, %c0_287] {strides = array<i32: 1, 1, 1, 2>} : memref<1x3x32x32xf32, #tpu.memory_space<vmem>>, vector<1x3x1x16xf32>
    %163 = vector.shape_cast %162 : vector<1x3x1x16xf32> to vector<3x16xf32>
    %c6_288 = arith.constant 6 : index
    %c208_289 = arith.constant 208 : index
    %164 = vector.load %arg6[%c6_288, %c208_289] : memref<12x256xf32, #tpu.memory_space<vmem>>, vector<3x16xf32>
    tpu.vector_store %arg6[%c6_288, %c208_289], %163 {strides = array<i32>} : memref<12x256xf32, #tpu.memory_space<vmem>>, vector<3x16xf32>,
    %c0_290 = arith.constant 0 : index
    %c0_291 = arith.constant 0 : index
    %c27_292 = arith.constant 27 : index
    %c1_293 = arith.constant 1 : index
    %165 = tpu.strided_load %arg2[%c0_290, %c0_291, %c27_292, %c1_293] {strides = array<i32: 1, 1, 1, 2>} : memref<1x3x32x32xf32, #tpu.memory_space<vmem>>, vector<1x3x1x16xf32>
    %166 = vector.shape_cast %165 : vector<1x3x1x16xf32> to vector<3x16xf32>
    %c9_294 = arith.constant 9 : index
    %c208_295 = arith.constant 208 : index
    %167 = vector.load %arg6[%c9_294, %c208_295] : memref<12x256xf32, #tpu.memory_space<vmem>>, vector<3x16xf32>
    tpu.vector_store %arg6[%c9_294, %c208_295], %166 {strides = array<i32>} : memref<12x256xf32, #tpu.memory_space<vmem>>, vector<3x16xf32>,
    %c0_296 = arith.constant 0 : index
    %c0_297 = arith.constant 0 : index
    %c28 = arith.constant 28 : index
    %c0_298 = arith.constant 0 : index
    %168 = tpu.strided_load %arg2[%c0_296, %c0_297, %c28, %c0_298] {strides = array<i32: 1, 1, 1, 2>} : memref<1x3x32x32xf32, #tpu.memory_space<vmem>>, vector<1x3x1x16xf32>
    %169 = vector.shape_cast %168 : vector<1x3x1x16xf32> to vector<3x16xf32>
    %c0_299 = arith.constant 0 : index
    %c224 = arith.constant 224 : index
    %170 = vector.load %arg6[%c0_299, %c224] : memref<12x256xf32, #tpu.memory_space<vmem>>, vector<3x16xf32>
    tpu.vector_store %arg6[%c0_299, %c224], %169 {strides = array<i32>} : memref<12x256xf32, #tpu.memory_space<vmem>>, vector<3x16xf32>,
    %c0_300 = arith.constant 0 : index
    %c0_301 = arith.constant 0 : index
    %c28_302 = arith.constant 28 : index
    %c1_303 = arith.constant 1 : index
    %171 = tpu.strided_load %arg2[%c0_300, %c0_301, %c28_302, %c1_303] {strides = array<i32: 1, 1, 1, 2>} : memref<1x3x32x32xf32, #tpu.memory_space<vmem>>, vector<1x3x1x16xf32>
    %172 = vector.shape_cast %171 : vector<1x3x1x16xf32> to vector<3x16xf32>
    %c3_304 = arith.constant 3 : index
    %c224_305 = arith.constant 224 : index
    %173 = vector.load %arg6[%c3_304, %c224_305] : memref<12x256xf32, #tpu.memory_space<vmem>>, vector<3x16xf32>
    tpu.vector_store %arg6[%c3_304, %c224_305], %172 {strides = array<i32>} : memref<12x256xf32, #tpu.memory_space<vmem>>, vector<3x16xf32>,
    %c0_306 = arith.constant 0 : index
    %c0_307 = arith.constant 0 : index
    %c29 = arith.constant 29 : index
    %c0_308 = arith.constant 0 : index
    %174 = tpu.strided_load %arg2[%c0_306, %c0_307, %c29, %c0_308] {strides = array<i32: 1, 1, 1, 2>} : memref<1x3x32x32xf32, #tpu.memory_space<vmem>>, vector<1x3x1x16xf32>
    %175 = vector.shape_cast %174 : vector<1x3x1x16xf32> to vector<3x16xf32>
    %c6_309 = arith.constant 6 : index
    %c224_310 = arith.constant 224 : index
    %176 = vector.load %arg6[%c6_309, %c224_310] : memref<12x256xf32, #tpu.memory_space<vmem>>, vector<3x16xf32>
    tpu.vector_store %arg6[%c6_309, %c224_310], %175 {strides = array<i32>} : memref<12x256xf32, #tpu.memory_space<vmem>>, vector<3x16xf32>,
    %c0_311 = arith.constant 0 : index
    %c0_312 = arith.constant 0 : index
    %c29_313 = arith.constant 29 : index
    %c1_314 = arith.constant 1 : index
    %177 = tpu.strided_load %arg2[%c0_311, %c0_312, %c29_313, %c1_314] {strides = array<i32: 1, 1, 1, 2>} : memref<1x3x32x32xf32, #tpu.memory_space<vmem>>, vector<1x3x1x16xf32>
    %178 = vector.shape_cast %177 : vector<1x3x1x16xf32> to vector<3x16xf32>
    %c9_315 = arith.constant 9 : index
    %c224_316 = arith.constant 224 : index
    %179 = vector.load %arg6[%c9_315, %c224_316] : memref<12x256xf32, #tpu.memory_space<vmem>>, vector<3x16xf32>
    tpu.vector_store %arg6[%c9_315, %c224_316], %178 {strides = array<i32>} : memref<12x256xf32, #tpu.memory_space<vmem>>, vector<3x16xf32>,
    %c0_317 = arith.constant 0 : index
    %c0_318 = arith.constant 0 : index
    %c30 = arith.constant 30 : index
    %c0_319 = arith.constant 0 : index
    %180 = tpu.strided_load %arg2[%c0_317, %c0_318, %c30, %c0_319] {strides = array<i32: 1, 1, 1, 2>} : memref<1x3x32x32xf32, #tpu.memory_space<vmem>>, vector<1x3x1x16xf32>
    %181 = vector.shape_cast %180 : vector<1x3x1x16xf32> to vector<3x16xf32>
    %c0_320 = arith.constant 0 : index
    %c240 = arith.constant 240 : index
    %182 = vector.load %arg6[%c0_320, %c240] : memref<12x256xf32, #tpu.memory_space<vmem>>, vector<3x16xf32>
    tpu.vector_store %arg6[%c0_320, %c240], %181 {strides = array<i32>} : memref<12x256xf32, #tpu.memory_space<vmem>>, vector<3x16xf32>,
    %c0_321 = arith.constant 0 : index
    %c0_322 = arith.constant 0 : index
    %c30_323 = arith.constant 30 : index
    %c1_324 = arith.constant 1 : index
    %183 = tpu.strided_load %arg2[%c0_321, %c0_322, %c30_323, %c1_324] {strides = array<i32: 1, 1, 1, 2>} : memref<1x3x32x32xf32, #tpu.memory_space<vmem>>, vector<1x3x1x16xf32>
    %184 = vector.shape_cast %183 : vector<1x3x1x16xf32> to vector<3x16xf32>
    %c3_325 = arith.constant 3 : index
    %c240_326 = arith.constant 240 : index
    %185 = vector.load %arg6[%c3_325, %c240_326] : memref<12x256xf32, #tpu.memory_space<vmem>>, vector<3x16xf32>
    tpu.vector_store %arg6[%c3_325, %c240_326], %184 {strides = array<i32>} : memref<12x256xf32, #tpu.memory_space<vmem>>, vector<3x16xf32>,
    %c0_327 = arith.constant 0 : index
    %c0_328 = arith.constant 0 : index
    %c31 = arith.constant 31 : index
    %c0_329 = arith.constant 0 : index
    %186 = tpu.strided_load %arg2[%c0_327, %c0_328, %c31, %c0_329] {strides = array<i32: 1, 1, 1, 2>} : memref<1x3x32x32xf32, #tpu.memory_space<vmem>>, vector<1x3x1x16xf32>
    %187 = vector.shape_cast %186 : vector<1x3x1x16xf32> to vector<3x16xf32>
    %c6_330 = arith.constant 6 : index
    %c240_331 = arith.constant 240 : index
    %188 = vector.load %arg6[%c6_330, %c240_331] : memref<12x256xf32, #tpu.memory_space<vmem>>, vector<3x16xf32>
    tpu.vector_store %arg6[%c6_330, %c240_331], %187 {strides = array<i32>} : memref<12x256xf32, #tpu.memory_space<vmem>>, vector<3x16xf32>,
    %c0_332 = arith.constant 0 : index
    %c0_333 = arith.constant 0 : index
    %c31_334 = arith.constant 31 : index
    %c1_335 = arith.constant 1 : index
    %189 = tpu.strided_load %arg2[%c0_332, %c0_333, %c31_334, %c1_335] {strides = array<i32: 1, 1, 1, 2>} : memref<1x3x32x32xf32, #tpu.memory_space<vmem>>, vector<1x3x1x16xf32>
    %190 = vector.shape_cast %189 : vector<1x3x1x16xf32> to vector<3x16xf32>
    %c9_336 = arith.constant 9 : index
    %c240_337 = arith.constant 240 : index
    %191 = vector.load %arg6[%c9_336, %c240_337] : memref<12x256xf32, #tpu.memory_space<vmem>>, vector<3x16xf32>
    tpu.vector_store %arg6[%c9_336, %c240_337], %190 {strides = array<i32>} : memref<12x256xf32, #tpu.memory_space<vmem>>, vector<3x16xf32>,
    %c0_338 = arith.constant 0 : index
    %c0_339 = arith.constant 0 : index
    %192 = vector.load %arg3[%c0_338, %c0_339] : memref<64x12xf32, #tpu.memory_space<vmem>>, vector<64x12xf32>
    %c0_340 = arith.constant 0 : index
    %c0_341 = arith.constant 0 : index
    %193 = vector.load %arg6[%c0_340, %c0_341] : memref<12x256xf32, #tpu.memory_space<vmem>>, vector<12x256xf32>
    %cst = arith.constant dense<0.000000e+00> : vector<64x256xf32>
    %194 = tpu.matmul %192, %193, %cst {dimension_numbers = #tpu.dot_dimension_numbers<[1], [0], [0], [1], [0, 0, 1, 1], [], []>} : vector<64x12xf32>, vector<12x256xf32>, vector<64x256xf32> -> vector<64x256xf32>
    %c0_342 = arith.constant 0 : index
    %c0_343 = arith.constant 0 : index
    %195 = vector.load %arg4[%c0_342, %c0_343] : memref<64x1xf32, #tpu.memory_space<vmem>>, vector<64x1xf32>
    %196 = vector.broadcast %195 : vector<64x1xf32> to vector<64x256xf32>
    %197 = arith.addf %194, %196 : vector<64x256xf32>
    %c0_344 = arith.constant 0 : index
    %c0_345 = arith.constant 0 : index
    %c0_346 = arith.constant 0 : index
    %198 = vector.load %arg5[%c0_344, %c0_345, %c0_346] : memref<1x64x256xf32, #tpu.memory_space<vmem>>, vector<1x64x256xf32>
    %199 = vector.shape_cast %198 : vector<1x64x256xf32> to vector<64x256xf32>
    %200 = vector.shape_cast %197 : vector<64x256xf32> to vector<1x64x256xf32>
    tpu.vector_store %arg5[%c0_344, %c0_345, %c0_346], %200 {strides = array<i32>} : memref<1x64x256xf32, #tpu.memory_space<vmem>>, vector<1x64x256xf32>,
    return
  }
  func.func @transform_0(%arg0: i32, %arg1: i32) -> (i32, i32, i32, i32) {
    %c0_i32 = arith.constant 0 : i32
    %c0_i32_0 = arith.constant 0 : i32
    %c0_i32_1 = arith.constant 0 : i32
    return %arg0, %c0_i32, %arg1, %c0_i32_0 : i32, i32, i32, i32
  }
  func.func @transform_1(%arg0: i32, %arg1: i32) -> (i32, i32) {
    %c0_i32 = arith.constant 0 : i32
    %c0_i32_0 = arith.constant 0 : i32
    %c0_i32_1 = arith.constant 0 : i32
    return %c0_i32, %c0_i32_0 : i32, i32
  }
  func.func @transform_2(%arg0: i32, %arg1: i32) -> (i32, i32) {
    %c0_i32 = arith.constant 0 : i32
    %c0_i32_0 = arith.constant 0 : i32
    %c0_i32_1 = arith.constant 0 : i32
    return %c0_i32, %c0_i32_0 : i32, i32
  }
  func.func @transform_3(%arg0: i32, %arg1: i32) -> (i32, i32, i32) {
    %c0_i32 = arith.constant 0 : i32
    %c0_i32_0 = arith.constant 0 : i32
    return %arg0, %c0_i32, %arg1 : i32, i32, i32
  }
}

module attributes {stable_mosaic.version = 11 : i64} {
  func.func @_patch_linear_kernel(%arg0: i32, %arg1: i32, %arg2: memref<1x12x256xf32, #tpu.memory_space<vmem>>, %arg3: memref<64x12xf32, #tpu.memory_space<vmem>>, %arg4: memref<64x1xf32, #tpu.memory_space<vmem>>, %arg5: memref<1x64x256xf32, #tpu.memory_space<vmem>>) attributes {dimension_semantics = [#tpu.dimension_semantics<parallel>, #tpu.dimension_semantics<parallel>], iteration_bounds = array<i64: 2, 1>, scalar_prefetch = 0 : i64, scratch_operands = 0 : i64, tpu.core_type = #tpu.core_type<tc>, window_params = [{transform_indices = @transform_0, window_bounds = array<i64: 1, 12, 256>}, {pipeline_mode = #tpu.pipeline_mode<synchronous>, transform_indices = @transform_1, window_bounds = array<i64: 64, 12>}, {pipeline_mode = #tpu.pipeline_mode<synchronous>, transform_indices = @transform_2, window_bounds = array<i64: 64, 1>}, {transform_indices = @transform_3, window_bounds = array<i64: 1, 64, 256>}]} {
    %c0 = arith.constant 0 : index
    %c0_0 = arith.constant 0 : index
    %0 = vector.load %arg3[%c0, %c0_0] : memref<64x12xf32, #tpu.memory_space<vmem>>, vector<64x12xf32>
    %c0_1 = arith.constant 0 : index
    %c0_2 = arith.constant 0 : index
    %c0_3 = arith.constant 0 : index
    %1 = vector.load %arg2[%c0_1, %c0_2, %c0_3] : memref<1x12x256xf32, #tpu.memory_space<vmem>>, vector<1x12x256xf32>
    %2 = vector.shape_cast %1 : vector<1x12x256xf32> to vector<12x256xf32>
    %cst = arith.constant dense<0.000000e+00> : vector<64x256xf32>
    %3 = tpu.matmul %0, %2, %cst {dimension_numbers = #tpu.dot_dimension_numbers<[1], [0], [0], [1], [0, 0, 1, 1], [], []>} : vector<64x12xf32>, vector<12x256xf32>, vector<64x256xf32> -> vector<64x256xf32>
    %c0_4 = arith.constant 0 : index
    %c0_5 = arith.constant 0 : index
    %4 = vector.load %arg4[%c0_4, %c0_5] : memref<64x1xf32, #tpu.memory_space<vmem>>, vector<64x1xf32>
    %5 = vector.broadcast %4 : vector<64x1xf32> to vector<64x256xf32>
    %6 = arith.addf %3, %5 : vector<64x256xf32>
    %c0_6 = arith.constant 0 : index
    %c0_7 = arith.constant 0 : index
    %c0_8 = arith.constant 0 : index
    %7 = vector.load %arg5[%c0_6, %c0_7, %c0_8] : memref<1x64x256xf32, #tpu.memory_space<vmem>>, vector<1x64x256xf32>
    %8 = vector.shape_cast %7 : vector<1x64x256xf32> to vector<64x256xf32>
    %9 = vector.shape_cast %6 : vector<64x256xf32> to vector<1x64x256xf32>
    tpu.vector_store %arg5[%c0_6, %c0_7, %c0_8], %9 {strides = array<i32>} : memref<1x64x256xf32, #tpu.memory_space<vmem>>, vector<1x64x256xf32>,
    return
  }
  func.func @transform_0(%arg0: i32, %arg1: i32) -> (i32, i32, i32) {
    %c0_i32 = arith.constant 0 : i32
    %c0_i32_0 = arith.constant 0 : i32
    return %arg0, %c0_i32, %arg1 : i32, i32, i32
  }
  func.func @transform_1(%arg0: i32, %arg1: i32) -> (i32, i32) {
    %c0_i32 = arith.constant 0 : i32
    %c0_i32_0 = arith.constant 0 : i32
    %c0_i32_1 = arith.constant 0 : i32
    return %c0_i32, %c0_i32_0 : i32, i32
  }
  func.func @transform_2(%arg0: i32, %arg1: i32) -> (i32, i32) {
    %c0_i32 = arith.constant 0 : i32
    %c0_i32_0 = arith.constant 0 : i32
    %c0_i32_1 = arith.constant 0 : i32
    return %c0_i32, %c0_i32_0 : i32, i32
  }
  func.func @transform_3(%arg0: i32, %arg1: i32) -> (i32, i32, i32) {
    %c0_i32 = arith.constant 0 : i32
    %c0_i32_0 = arith.constant 0 : i32
    return %arg0, %c0_i32, %arg1 : i32, i32, i32
  }
}

</mosaic_0001>

<llo_original>
// kernel: tpu_custom_call.1
$region0: #{tpu_custom_call.1}
  #allocation0 [shape = 'u32[]', space=smem, size = 0x4, offset = 0x4, fixed_abs, tag = 'smem constant byte address 0x4 - core index']
  #allocation1 [shape = 'u32[72,128]{1,0:T(1,128)}', space=vmem, size = 0x9000, scoped, tag = 'internal scratch']
  %s0 = inlined_call_operand.vmem [shape: f32[2,12,256], index: 0, kind: input, shape index: {}]
  %s1 = inlined_call_operand.vmem [shape: f32[64,12], index: 1, kind: input, shape index: {}]
  %s2 = inlined_call_operand.vmem [shape: f32[64,1], index: 2, kind: input, shape index: {}]
  %s3 = inlined_call_operand.hbm [shape: f32[2,64,256], index: 3, kind: output, shape index: {}]
  %s4 = sld [smem:[#allocation0]]
  $region45: #{tpu_custom_call.1} parent=0
    _
  %s6 = ssub.s32 1, %s4
  %s7 = scalar_select 0, %s6, %s4
  $region1: #{tpu_custom_call.1} parent=0
    #allocation2 [shape = 'u8[131072]{0}', space=vmem, size = 0x20000, scoped, tag = 'output window, operand 0']
    #allocation3 [shape = 's32[2]{0}', space=sflag, size = 0x8, scoped, tag = 'scoped memory for tpu_custom_call.1']
    %8 = vsyncpa [#allocation3], 0
    %s9 = scalar_lea.sflag [#allocation3], 1
    %10 = vsyncpa %s9, 0
    loop: start=0, step=1, limit=4
    $region2: #{tpu_custom_call.1} parent=1 // loop_pre_header
      _
    $region3: #{tpu_custom_call.1} parent=1 // loop_header
      %s12 = sphi 0, %s16
      %p13 = scmp.ge.s32.totalorder %s12, 4
      %s19 = sphi 0, %s31
      %s20 = sphi 0, %s27
      %s21 = sphi 0, %s19
      %s22 = sphi 0, %s20
      %s23 = sphi 0, %s21
      %s24 = sphi 0, %s22
      %s36 = sphi 0, %s38
      %s39 = sphi 0, %s36
      %s40 = sphi 0, %s39
      %s56 = sphi 0, %s40
      %s60 = sphi 0, %s60
      %s62 = sphi 0, %s60
      %s63 = sphi 0, %s62
      %s77 = sphi 0, %s63
      %s81 = sphi 0, %s81
      %s83 = sphi 0, %s81
      %s84 = sphi 0, %s83
      %s98 = sphi 0, %s84
      %s106 = sphi 0, %s108
      %s109 = sphi 0, %s106
      %s110 = sphi 0, %s109
      %s126 = sphi 0, %s110
    $region4: #{tpu_custom_call.1} parent=1 // loop_header_branch
      %15 = sbr.rel (%p13) target = $region8
    $region5: #{tpu_custom_call.1} parent=1 // loop_body
      %s17 = ssub.s32 %s12, 1
      %s18 = ssub.s32 %s12, 2
      %s25 = sadd.s32 1, %s20
      %p26 = scmp.ge.s32.totalorder %s25, 1
      %s27 = scalar_select %p26, 0, %s25
      %s28 = sadd.s32 1, %s19
      %s29 = scalar_select %p26, %s28, %s19
      %p30 = scmp.ge.s32.totalorder %s29, 2
      %s31 = scalar_select %p30, 0, %s29
      %s32 = ssub.s32 %s19, %s31
      %s33 = ssub.s32 %s20, %s27
      %s34 = sor.u32 %s32, %s33
      %p35 = scmp.eq.s32.totalorder %s34, 0
      %s37 = sadd.s32 %s36, 1
      %s38 = scalar_select %p35, %s36, %s37
      %p41 = pneg %p35
      %p42 = scmp.eq.s32.totalorder %s12, 1
      %p43 = por %p41, %p42
      %p44 = scmp.ne.s32.totalorder %s36, %s39
      %p45 = scmp.eq.s32.totalorder %s12, 0
      %p46 = por %p44, %p45
      %p47 = scmp.ne.s32.totalorder %s36, %s39
      %p48 = scmp.eq.s32.totalorder %s17, 1
      %p49 = por %p47, %p48
      %p50 = scmp.ne.s32.totalorder %s39, %s40
      %p51 = scmp.eq.s32.totalorder %s17, 0
      %p52 = por %p50, %p51
      %p53 = scmp.ne.s32.totalorder %s39, %s40
      %p54 = scmp.eq.s32.totalorder %s18, 1
      %p55 = por %p53, %p54
      %p57 = scmp.ne.s32.totalorder %s40, %s56
      %p58 = scmp.eq.s32.totalorder %s18, 0
      %p59 = por %p57, %p58
      %s61 = sadd.s32 %s60, 1
      %p64 = scmp.eq.s32.totalorder %s12, 1
      %p65 = scmp.ne.s32.totalorder %s60, %s62
      %p66 = scmp.eq.s32.totalorder %s12, 0
      %p67 = por %p65, %p66
      %p68 = scmp.ne.s32.totalorder %s60, %s62
      %p69 = scmp.eq.s32.totalorder %s17, 1
      %p70 = por %p68, %p69
      %p71 = scmp.ne.s32.totalorder %s62, %s63
      %p72 = scmp.eq.s32.totalorder %s17, 0
      %p73 = por %p71, %p72
      %p74 = scmp.ne.s32.totalorder %s62, %s63
      %p75 = scmp.eq.s32.totalorder %s18, 1
      %p76 = por %p74, %p75
      %p78 = scmp.ne.s32.totalorder %s63, %s77
      %p79 = scmp.eq.s32.totalorder %s18, 0
      %p80 = por %p78, %p79
      %s82 = sadd.s32 %s81, 1
      %p85 = scmp.eq.s32.totalorder %s12, 1
      %p86 = scmp.ne.s32.totalorder %s81, %s83
      %p87 = scmp.eq.s32.totalorder %s12, 0
      %p88 = por %p86, %p87
      %p89 = scmp.ne.s32.totalorder %s81, %s83
      %p90 = scmp.eq.s32.totalorder %s17, 1
      %p91 = por %p89, %p90
      %p92 = scmp.ne.s32.totalorder %s83, %s84
      %p93 = scmp.eq.s32.totalorder %s17, 0
      %p94 = por %p92, %p93
      %p95 = scmp.ne.s32.totalorder %s83, %s84
      %p96 = scmp.eq.s32.totalorder %s18, 1
      %p97 = por %p95, %p96
      %p99 = scmp.ne.s32.totalorder %s84, %s98
      %p100 = scmp.eq.s32.totalorder %s18, 0
      %p101 = por %p99, %p100
      %s102 = ssub.s32 %s19, %s31
      %s103 = ssub.s32 %s20, %s27
      %s104 = sor.u32 %s102, %s103
      %p105 = scmp.eq.s32.totalorder %s104, 0
      %s107 = sadd.s32 %s106, 1
      %s108 = scalar_select %p105, %s106, %s107
      %p111 = pneg %p105
      %p112 = scmp.eq.s32.totalorder %s12, 1
      %p113 = por %p111, %p112
      %p114 = scmp.ne.s32.totalorder %s106, %s109
      %p115 = scmp.eq.s32.totalorder %s12, 0
      %p116 = por %p114, %p115
      %p117 = scmp.ne.s32.totalorder %s106, %s109
      %p118 = scmp.eq.s32.totalorder %s17, 1
      %p119 = por %p117, %p118
      %p120 = scmp.ne.s32.totalorder %s109, %s110
      %p121 = scmp.eq.s32.totalorder %s17, 0
      %p122 = por %p120, %p121
      %p123 = scmp.ne.s32.totalorder %s109, %s110
      %p124 = scmp.eq.s32.totalorder %s18, 1
      %p125 = por %p123, %p124
      %p127 = scmp.ne.s32.totalorder %s110, %s126
      %p128 = scmp.eq.s32.totalorder %s18, 0
      %p129 = por %p127, %p128
      %p130 = scmp.le.s32.totalorder 1, %s12
      %p131 = scmp.lt.s32.totalorder %s12, 3
      %p132 = pnand %p130, %p131
      %p133 = pneg %p132
      // Predicated region
      $region9: #{tpu_custom_call.1} parent=5 // pred_check
        _
      $region10: #{tpu_custom_call.1} parent=5 // pred_check_branch
        %135 = sbr.rel (%p132) target = $region12
      $region11: #{tpu_custom_call.1} parent=5 // pred_region
        %s136 = ssub.s32 %s12, 1
        // Predicated region
        $region13: #{tpu_custom_call.1} parent=11 // pred_check
          %p137 = pneg %p73
        $region14: #{tpu_custom_call.1} parent=11 // pred_check_branch
          %139 = sbr.rel (%p137) target = $region16
        $region15: #{tpu_custom_call.1} parent=11 // pred_region
          _
        $region16: #{tpu_custom_call.1} parent=11 // pred_fallthru
          _
        // Predicated region
        $region17: #{tpu_custom_call.1} parent=11 // pred_check
          %p140 = pneg %p94
        $region18: #{tpu_custom_call.1} parent=11 // pred_check_branch
          %142 = sbr.rel (%p140) target = $region20
        $region19: #{tpu_custom_call.1} parent=11 // pred_region
          _
        $region20: #{tpu_custom_call.1} parent=11 // pred_fallthru
          _
      $region12: #{tpu_custom_call.1} parent=5 // pred_fallthru
        _
      %p143 = scmp.lt.s32.totalorder %s12, 2
      // Predicated region
      $region21: #{tpu_custom_call.1} parent=5 // pred_check
        %p144 = pneg %p143
      $region22: #{tpu_custom_call.1} parent=5 // pred_check_branch
        %146 = sbr.rel (%p144) target = $region24
      $region23: #{tpu_custom_call.1} parent=5 // pred_region
        // Predicated region
        $region25: #{tpu_custom_call.1} parent=23 // pred_check
          %p147 = pneg %p46
        $region26: #{tpu_custom_call.1} parent=23 // pred_check_branch
          %149 = sbr.rel (%p147) target = $region28
        $region27: #{tpu_custom_call.1} parent=23 // pred_region
          %s150 = smul.u32 2, %s20
          %p151 = scmp.lt.s32.totalorder %s19, 1
          %s152 = scalar_select %p151, %s19, 1
          %p153 = scmp.lt.s32.totalorder %s150, 1
          %s154 = scalar_select %p153, %s150, 1
          %s155 = smul.addr %s152, 4
          %s156 = sadd.s32 %s154, %s155
          %s157 = smul.addr %s156, 8
          %s158 = scalar_lea.vmem %s0, %s157
          %s159 = smul.u32 2, %s20
        $region28: #{tpu_custom_call.1} parent=23 // pred_fallthru
          _
      $region24: #{tpu_custom_call.1} parent=5 // pred_fallthru
        _
      %p160 = scmp.le.s32.totalorder 1, %s12
      %p161 = scmp.lt.s32.totalorder %s12, 3
      %p162 = pnand %p160, %p161
      %p163 = pneg %p162
      // Predicated region
      $region29: #{tpu_custom_call.1} parent=5 // pred_check
        _
      $region30: #{tpu_custom_call.1} parent=5 // pred_check_branch
        %165 = sbr.rel (%p162) target = $region32
      $region31: #{tpu_custom_call.1} parent=5 // pred_region
        %s166 = ssub.s32 %s12, 1
        %s167 = smul.u32 2, %s22
        %p168 = scmp.lt.s32.totalorder %s21, 1
        %s169 = scalar_select %p168, %s21, 1
        %p170 = scmp.lt.s32.totalorder %s167, 1
        %s171 = scalar_select %p170, %s167, 1
        %s172 = smul.addr %s169, 4
        %s173 = sadd.s32 %s171, %s172
        %s174 = smul.addr %s173, 8
        %s175 = scalar_lea.vmem %s0, %s174
        %p176 = pneg %p52
        %p177 = pneg %p49
        %p178 = pneg %p73
        %p179 = pneg %p70
        %p180 = pneg %p94
        %p181 = pneg %p91
        %p182 = pneg %p122
        %p183 = pneg %p119
        %s184 = sand.u32 %s109, 1
        %s185 = scalar_lea.sflag [#allocation3], %s184
        %s186 = sand.u32 %s109, 1
        %s187 = smul.addr %s186, 128
        %s188 = scalar_lea.vmem [#allocation2], %s187
        %s189 = smul.u32 2, %s22
        %p190 = scmp.lt.s32.totalorder %s21, 1
        %s191 = scalar_select %p190, %s21, 1
        %p192 = scmp.lt.s32.totalorder %s189, 1
        %s193 = scalar_select %p192, %s189, 1
        %s194 = smul.addr %s191, 4
        %s195 = sadd.s32 %s193, %s194
        %s196 = smul.addr %s195, 8
        %s197 = scalar_lea.vmem %s0, %s196
        %s198 = smul.u32 2, %s22
        %s199 = smul.u32 2, %s22
        %v200 = vld [vmem:[%s1] sm:$0xff]
        %v201 = vld [vmem:[%s1 + $0x8] sm:$0xff]
        %v202 = vld [vmem:[%s1 + $0x10] sm:$0xff]
        %v203 = vld [vmem:[%s1 + $0x18] sm:$0xff]
        %v204 = vld [vmem:[%s1 + $0x20] sm:$0xff]
        %v205 = vld [vmem:[%s1 + $0x28] sm:$0xff]
        %v206 = vld [vmem:[%s1 + $0x30] sm:$0xff]
        %v207 = vld [vmem:[%s1 + $0x38] sm:$0xff]
        %v208 = vld [vmem:[%s197] sm:$0xff]
        %v209 = vld [vmem:[%s197 + $0x8] sm:$0xff]
        %v210 = vld [vmem:[%s197 + $0x10] sm:$0xf]
        %v211 = vld [vmem:[%s197 + $0x18] sm:$0xf]
        %v212 = vld [vmem:[%s2] sm:$0xff]
        %v213 = vld [vmem:[%s2 + $0x8] sm:$0xff]
        %v214 = vld [vmem:[%s2 + $0x10] sm:$0xff]
        %v215 = vld [vmem:[%s2 + $0x18] sm:$0xff]
        %v216 = vld [vmem:[%s2 + $0x20] sm:$0xff]
        %v217 = vld [vmem:[%s2 + $0x28] sm:$0xff]
        %v218 = vld [vmem:[%s2 + $0x30] sm:$0xff]
        %v219 = vld [vmem:[%s2 + $0x38] sm:$0xff]
        %221 = vset.pattern.permute.xlu0 0
        %222 = vperm.xlu0 %221, %v212
        %v223 = vpop.permute.xlu0 %222
        %226 = vset.pattern.permute.xlu0 0
        %227 = vperm.xlu0 %226, %v213
        %v228 = vpop.permute.xlu0 %227
        %231 = vset.pattern.permute.xlu0 0
        %232 = vperm.xlu0 %231, %v214
        %v233 = vpop.permute.xlu0 %232
        %236 = vset.pattern.permute.xlu0 0
        %237 = vperm.xlu0 %236, %v215
        %v238 = vpop.permute.xlu0 %237
        %241 = vset.pattern.permute.xlu0 0
        %242 = vperm.xlu0 %241, %v216
        %v243 = vpop.permute.xlu0 %242
        %246 = vset.pattern.permute.xlu0 0
        %247 = vperm.xlu0 %246, %v217
        %v248 = vpop.permute.xlu0 %247
        %251 = vset.pattern.permute.xlu0 0
        %252 = vperm.xlu0 %251, %v218
        %v253 = vpop.permute.xlu0 %252
        %256 = vset.pattern.permute.xlu0 0
        %257 = vperm.xlu0 %256, %v219
        %v258 = vpop.permute.xlu0 %257
        %vm260 = vcmask 97280
        %v262 = vsel %vm260, %v200, 0
        %v265 = vsel %vm260, %v201, 0
        %v268 = vsel %vm260, %v202, 0
        %v271 = vsel %vm260, %v203, 0
        %v274 = vsel %vm260, %v204, 0
        %v277 = vsel %vm260, %v205, 0
        %v280 = vsel %vm260, %v206, 0
        %v283 = vsel %vm260, %v207, 0
        %vm285 = vcmask 1043456
        %v287 = vsel %vm285, %v210, 0
        %v290 = vsel %vm285, %v211, 0
        %292 = vmatpush.msra.mxu0 0.0
        %293 = vmatpush.msra.mxu0 0.0
        %294 = vmatpush.msra.mxu0 0.0
        %295 = vmatpush.msra.mxu0 0.0
        %296 = vmatpush.msra.mxu0 0.0
        %297 = vmatpush.msra.mxu0 0.0
        %298 = vmatpush.msra.mxu0 0.0
        %299 = vmatpush.msra.mxu0 0.0
        %300 = vmatpush.msra.mxu0 0.0
        %301 = vmatpush.msra.mxu0 0.0
        %302 = vmatpush.msra.mxu0 0.0
        %303 = vmatpush.msra.mxu0 0.0
        %304 = vmatpush.msra.mxu0 0.0
        %305 = vmatpush.msra.mxu0 0.0
        %306 = vmatpush.msra.mxu0 %v287
        %307 = vmatpush.msra.mxu0 %v208
        %308 = vmatmul.f32.gmra.mxu0 %v262
        %v309 = vpop.f32.mrf.mxu0
        %v310 = vadd.f32 %v223, %v309
        %311 = vmatmul.f32.gmra.mxu0 %v265
        %v312 = vpop.f32.mrf.mxu0
        %v313 = vadd.f32 %v228, %v312
        %314 = vmatmul.f32.gmra.mxu0 %v268
        %v315 = vpop.f32.mrf.mxu0
        %v316 = vadd.f32 %v233, %v315
        %317 = vmatmul.f32.gmra.mxu0 %v271
        %v318 = vpop.f32.mrf.mxu0
        %v319 = vadd.f32 %v238, %v318
        %320 = vmatmul.f32.gmra.mxu0 %v274
        %v321 = vpop.f32.mrf.mxu0
        %v322 = vadd.f32 %v243, %v321
        %323 = vmatmul.f32.gmra.mxu0 %v277
        %v324 = vpop.f32.mrf.mxu0
        %v325 = vadd.f32 %v248, %v324
        %326 = vmatmul.f32.gmra.mxu0 %v280
        %v327 = vpop.f32.mrf.mxu0
        %v328 = vadd.f32 %v253, %v327
        %329 = vmatmul.f32.gmra.mxu0 %v283
        %v330 = vpop.f32.mrf.mxu0
        %v331 = vadd.f32 %v258, %v330
        %332 = vdwg.mxu0
        %333 = vmatpush.msra.mxu0 0.0
        %334 = vmatpush.msra.mxu0 0.0
        %335 = vmatpush.msra.mxu0 0.0
        %336 = vmatpush.msra.mxu0 0.0
        %337 = vmatpush.msra.mxu0 0.0
        %338 = vmatpush.msra.mxu0 0.0
        %339 = vmatpush.msra.mxu0 0.0
        %340 = vmatpush.msra.mxu0 0.0
        %341 = vmatpush.msra.mxu0 0.0
        %342 = vmatpush.msra.mxu0 0.0
        %343 = vmatpush.msra.mxu0 0.0
        %344 = vmatpush.msra.mxu0 0.0
        %345 = vmatpush.msra.mxu0 0.0
        %346 = vmatpush.msra.mxu0 0.0
        %347 = vmatpush.msra.mxu0 %v290
        %348 = vmatpush.msra.mxu0 %v209
        %349 = vmatmul.f32.gmra.mxu0 %v262
        %v350 = vpop.f32.mrf.mxu0
        %v351 = vadd.f32 %v223, %v350
        %352 = vmatmul.f32.gmra.mxu0 %v265
        %v353 = vpop.f32.mrf.mxu0
        %v354 = vadd.f32 %v228, %v353
        %355 = vmatmul.f32.gmra.mxu0 %v268
        %v356 = vpop.f32.mrf.mxu0
        %v357 = vadd.f32 %v233, %v356
        %358 = vmatmul.f32.gmra.mxu0 %v271
        %v359 = vpop.f32.mrf.mxu0
        %v360 = vadd.f32 %v238, %v359
        %361 = vmatmul.f32.gmra.mxu0 %v274
        %v362 = vpop.f32.mrf.mxu0
        %v363 = vadd.f32 %v243, %v362
        %364 = vmatmul.f32.gmra.mxu0 %v277
        %v365 = vpop.f32.mrf.mxu0
        %v366 = vadd.f32 %v248, %v365
        %367 = vmatmul.f32.gmra.mxu0 %v280
        %v368 = vpop.f32.mrf.mxu0
        %v369 = vadd.f32 %v253, %v368
        %370 = vmatmul.f32.gmra.mxu0 %v283
        %v371 = vpop.f32.mrf.mxu0
        %v372 = vadd.f32 %v258, %v371
        %373 = vdwg.mxu0
        %374 = vst [vmem:[%s188] sm:$0xff] %v310
        %375 = vst [vmem:[%s188 + $0x8] sm:$0xff] %v351
        %376 = vst [vmem:[%s188 + $0x10] sm:$0xff] %v313
        %377 = vst [vmem:[%s188 + $0x18] sm:$0xff] %v354
        %378 = vst [vmem:[%s188 + $0x20] sm:$0xff] %v316
        %379 = vst [vmem:[%s188 + $0x28] sm:$0xff] %v357
        %380 = vst [vmem:[%s188 + $0x30] sm:$0xff] %v319
        %381 = vst [vmem:[%s188 + $0x38] sm:$0xff] %v360
        %382 = vst [vmem:[%s188 + $0x40] sm:$0xff] %v322
        %383 = vst [vmem:[%s188 + $0x48] sm:$0xff] %v363
        %384 = vst [vmem:[%s188 + $0x50] sm:$0xff] %v325
        %385 = vst [vmem:[%s188 + $0x58] sm:$0xff] %v366
        %386 = vst [vmem:[%s188 + $0x60] sm:$0xff] %v328
        %387 = vst [vmem:[%s188 + $0x68] sm:$0xff] %v369
        %388 = vst [vmem:[%s188 + $0x70] sm:$0xff] %v331
        %389 = vst [vmem:[%s188 + $0x78] sm:$0xff] %v372
        %s390 = sand.u32 %s109, 1
        %s391 = scalar_lea.sflag [#allocation3], %s390
        %s392 = sand.u32 %s109, 1
        %s393 = smul.addr %s392, 128
        %s394 = scalar_lea.vmem [#allocation2], %s393
        // Predicated region
        $region33: #{tpu_custom_call.1} parent=31 // pred_check
          %p395 = pneg %p119
        $region34: #{tpu_custom_call.1} parent=31 // pred_check_branch
          %397 = sbr.rel (%p395) target = $region36
        $region35: #{tpu_custom_call.1} parent=31 // pred_region
          %s398 = smul.u32 2, %s22
          %400 = vsyncadd %s391, 0
          %s401 = smul.addr %s21, 16
          %s402 = sadd.s32 %s398, %s401
          %s403 = smul.addr %s402, 8
          %s404 = scalar_lea.hbm %s3, %s403
          %s405 = sshll.u32 %s394, 4
          %s406 = int_to_ptr.vmem [resolvable:$true] %s405
          %s407 = sshll.u32 %s404, 4
          %s408 = int_to_ptr.hbm [resolvable:$true] %s407
          %413 = dma.vmem_to_hbm [thread:$0]  %s406, 2048, %s408, %s391, 256, 256, 16
        $region36: #{tpu_custom_call.1} parent=31 // pred_fallthru
          _
      $region32: #{tpu_custom_call.1} parent=5 // pred_fallthru
        _
      %p414 = scmp.le.s32.totalorder 2, %s12
      // Predicated region
      $region37: #{tpu_custom_call.1} parent=5 // pred_check
        %p415 = pneg %p414
      $region38: #{tpu_custom_call.1} parent=5 // pred_check_branch
        %417 = sbr.rel (%p415) target = $region40
      $region39: #{tpu_custom_call.1} parent=5 // pred_region
        %s418 = ssub.s32 %s12, 2
        // Predicated region
        $region41: #{tpu_custom_call.1} parent=39 // pred_check
          %p419 = pneg %p125
        $region42: #{tpu_custom_call.1} parent=39 // pred_check_branch
          %421 = sbr.rel (%p419) target = $region44
        $region43: #{tpu_custom_call.1} parent=39 // pred_region
          %s422 = sand.u32 %s110, 1
          %s423 = scalar_lea.sflag [#allocation3], %s422
          %s424 = sand.u32 %s110, 1
          %s425 = smul.addr %s424, 128
          %s426 = scalar_lea.vmem [#allocation2], %s425
          %428 = dma.done %s423, 2048
        $region44: #{tpu_custom_call.1} parent=39 // pred_fallthru
          _
      $region40: #{tpu_custom_call.1} parent=5 // pred_fallthru
        _
    $region6: #{tpu_custom_call.1} parent=1 // loop_footer
      %s16 = sadd.s32 1, %s12
    $region7: #{tpu_custom_call.1} parent=1 // loop_footer_branch
      %11 = sbr.rel target = $region3
    $region8: #{tpu_custom_call.1} parent=1 // loop_exit
      _
    %429 = vsyncpa [#allocation3], 1
    %s430 = scalar_lea.sflag [#allocation3], 1
    %431 = vsyncpa %s430, 1

</llo_original>
